<compile_context>
chip_gen: v6e
topology: v6e:2x2x1
jax: 0.10.0
libtpu: 0.0.40
codegen_flags: <defaults>
</compile_context>

<pallas_src>
import functools

import jax
import jax.numpy as jnp
from jax import lax
from jax.experimental import pallas as pl
from jax.experimental.pallas import tpu as pltpu


# ----------------------------------------------------------------------------
# Fused kernel: LSTM recurrence + Linear head
# ----------------------------------------------------------------------------
def fused_lstm_linear_kernel(x_ref, wih_ref, whh_ref, b_ref, wlin_ref, blin_ref,
                             out_ref, pre_scr, hs_scr, *,
                             n_steps, batch, batch_pad, n_store_steps, unroll):
    """x_ref: (T*Bp, F) time-major rows (B padded to Bp); out_ref: (N, horizon)."""
    H = whh_ref.shape[0]
    N = out_ref.shape[0]
    Bp = batch_pad
    n_skip = n_steps - n_store_steps          # steps whose h is never needed again

    # Gate-column bookkeeping, computed ONCE (hoisted out of the recurrence).
    # Gate order is PyTorch's [i, f, g, o]; i/f/o columns are halved so that a
    # single tanh pass yields both sigmoid(x) = 0.5*tanh(x/2)+0.5 and tanh(x).
    lane_row = lax.broadcasted_iota(jnp.int32, (1, 4 * H), 1)
    is_g_row = jnp.logical_and(lane_row >= 2 * H, lane_row < 3 * H)
    col_scale = jnp.where(is_g_row, 1.0, 0.5)                  # (1, 4H)
    is_g = jnp.broadcast_to(is_g_row, (Bp, 4 * H))             # loop-invariant mask

    # Phase 1: batched input projection for ALL time steps, bias folded in,
    # i/f/o columns pre-scaled. One MXU call instead of T tiny ones.
    pre_scr[...] = (jnp.dot(x_ref[...], wih_ref[...],
                            preferred_element_type=jnp.float32)
                    + b_ref[...]) * col_scale

    # Recurrent weights kept vreg-resident (small H). Same pre-scaling.
    whh = whh_ref[...] * col_scale                             # (H, 4H)

    def cell(t, h, c):
        row = t * Bp
        if Bp % 8 == 0:
            row = pl.multiple_of(row, 8)       # aligned sublane slice every step
        gates = (pre_scr[pl.ds(row, Bp), :]
                 + jnp.dot(h, whh, preferred_element_type=jnp.float32))  # (Bp, 4H)
        th = jnp.tanh(gates)                                   # single EUP pass
        act = jnp.where(is_g, th, 0.5 * th + 0.5)              # sigmoid via identity

        i_g = act[:, 0 * H:1 * H]
        f_g = act[:, 1 * H:2 * H]
        g_g = act[:, 2 * H:3 * H]
        o_g = act[:, 3 * H:4 * H]

        c_new = f_g * c + i_g * g_g
        h_new = o_g * jnp.tanh(c_new)
        return h_new, c_new

    def step_nostore(t, carry):
        return cell(t, *carry)

    def step_store(t, carry):
        h_new, c_new = cell(t, *carry)
        srow = (t - n_skip) * batch
        if batch % 8 == 0:
            srow = pl.multiple_of(srow, 8)
        hs_scr[pl.ds(srow, batch), :] = h_new[:batch, :]       # genuine rows only
        return h_new, c_new

    carry = (jnp.zeros((Bp, H), jnp.float32), jnp.zeros((Bp, H), jnp.float32))
    if n_skip > 0:   # static Python split: stores are skipped at compile time
        carry = lax.fori_loop(0, n_skip, step_nostore, carry,
                              unroll=min(unroll, n_skip))
    lax.fori_loop(n_skip, n_steps, step_store, carry, unroll=True)

    # Phase 3: `lstm_out.view(seq_len, N, H)[-1]` is a raw row-major reshape,
    # i.e. the last N rows of the flattened (T*B, H) hidden states; hs_scr holds
    # exactly the last n_store_steps*batch of those rows.
    last = hs_scr[pl.ds(n_store_steps * batch - N, N), :]      # (N, H)
    out_ref[...] = (jnp.dot(last, wlin_ref[...],
                            preferred_element_type=jnp.float32)
                    + blin_ref[...])


# ----------------------------------------------------------------------------
# Wrapper
# ----------------------------------------------------------------------------
@functools.partial(jax.jit, static_argnames=("seq_len", "n_hidden"))
def lstm_prediction_forward(sequences, params, *, seq_len, n_hidden):
    """Faithful, fused reproduction of LSTMPrediction.forward."""
    N = sequences.shape[0]                     # len(sequences) == LSTM time dim
    T, B, H = N, seq_len, n_hidden
    # sequences.view(N, seq_len, -1) -> (T, B, F), time-major (batch_first=False)
    x = sequences.reshape(T, B, -1).astype(jnp.float32)
    F = x.shape[-1]
    horizon = params["w_lin_t"].shape[-1]

    # Pad the B (=seq_len) rows to a sublane multiple so every per-step slice in
    # the recurrence is (8,*)-aligned. Padded rows never reach the output.
    Bp = ((B + 7) // 8) * 8
    if Bp != B:
        x = jnp.pad(x, ((0, 0), (0, Bp - B), (0, 0)))
    x_flat = x.reshape(T * Bp, F)

    n_store_steps = -(-N // B)                 # ceil(N/B) final steps feed Phase 3

    kernel = functools.partial(
        fused_lstm_linear_kernel,
        n_steps=T, batch=B, batch_pad=Bp,
        n_store_steps=n_store_steps, unroll=min(T, 8))

    return pl.pallas_call(
        kernel,
        out_shape=jax.ShapeDtypeStruct((N, horizon), jnp.float32),
        grid_spec=pltpu.PrefetchScalarGridSpec(
            num_scalar_prefetch=0,
            grid=(1,),
            in_specs=[
                pl.BlockSpec((T * Bp, F), lambda i: (0, 0)),      # x (time-major rows)
                pl.BlockSpec((F, 4 * H), lambda i: (0, 0)),       # W_ih^T
                pl.BlockSpec((H, 4 * H), lambda i: (0, 0)),       # W_hh^T
                pl.BlockSpec((1, 4 * H), lambda i: (0, 0)),       # b_ih + b_hh
                pl.BlockSpec((H, horizon), lambda i: (0, 0)),     # W_lin^T
                pl.BlockSpec((1, horizon), lambda i: (0, 0)),     # b_lin
            ],
            out_specs=pl.BlockSpec((N, horizon), lambda i: (0, 0)),
            scratch_shapes=[
                pltpu.VMEM((T * Bp, 4 * H), jnp.float32),         # x@W_ih + b (pre-scaled)
                pltpu.VMEM((n_store_steps * B, H), jnp.float32),  # only the needed h rows
            ],
        ),
        compiler_params=pltpu.CompilerParams(
            dimension_semantics=("arbitrary",),
            vmem_limit_bytes=32 * 1024 * 1024),
    )(x_flat, params["w_ih_t"], params["w_hh_t"], params["b_lstm"],
      params["w_lin_t"], params["b_lin"])


# ----------------------------------------------------------------------------
# Deterministic parameter init (same shapes as nn.LSTM / nn.Linear)
# ----------------------------------------------------------------------------
def init_params(key, n_features, n_hidden, horizon):
    k = jax.random.split(key, 6)
    s = 1.0 / jnp.sqrt(jnp.float32(n_hidden))
    u = lambda kk, shape: jax.random.uniform(kk, shape, jnp.float32, -s, s)
    w_ih = u(k[0], (4 * n_hidden, n_features))   # PyTorch weight_ih_l0
    w_hh = u(k[1], (4 * n_hidden, n_hidden))     # PyTorch weight_hh_l0
    b_ih = u(k[2], (4 * n_hidden,))
    b_hh = u(k[3], (4 * n_hidden,))
    w_lin = u(k[4], (horizon, n_hidden))         # nn.Linear weight
    b_lin = u(k[5], (horizon,))
    return {
        "w_ih_t": w_ih.T,                                  # (F, 4H)
        "w_hh_t": w_hh.T,                                  # (H, 4H)
        "b_lstm": (b_ih + b_hh).reshape(1, 4 * n_hidden),  # (1, 4H)
        "w_lin_t": w_lin.T,                                # (H, horizon)
        "b_lin": b_lin.reshape(1, horizon),                # (1, horizon)
    }


# Pure-JAX reference (for sanity check)
def reference_forward(sequences, params, seq_len, n_hidden):
    N = sequences.shape[0]
    x = sequences.reshape(N, seq_len, -1).astype(jnp.float32)
    H = n_hidden
    h = jnp.zeros((seq_len, H), jnp.float32)
    c = jnp.zeros((seq_len, H), jnp.float32)
    outs = []
    for t in range(x.shape[0]):
        g = x[t] @ params["w_ih_t"] + h @ params["w_hh_t"] + params["b_lstm"]
        i = jax.nn.sigmoid(g[:, 0 * H:1 * H])
        f = jax.nn.sigmoid(g[:, 1 * H:2 * H])
        gg = jnp.tanh(g[:, 2 * H:3 * H])
        o = jax.nn.sigmoid(g[:, 3 * H:4 * H])
        c = f * c + i * gg
        h = o * jnp.tanh(c)
        outs.append(h)
    lstm_out = jnp.stack(outs, axis=0)
    last = lstm_out.reshape(seq_len, N, H)[-1]
    return last @ params["w_lin_t"] + params["b_lin"]


if __name__ == "__main__":
    n_features = 4
    n_hidden = 32
    seq_len = 8
    horizon = 1
    n_sequences = 8     # len(sequences) == LSTM time dimension (batch_first=False)

    key = jax.random.PRNGKey(0)
    k_param, k_data = jax.random.split(key)
    params = init_params(k_param, n_features, n_hidden, horizon)

    # sequences: (len(sequences), seq_len * n_features) -> viewed as (N, seq_len, F)
    sequences = jax.random.normal(
        k_data, (n_sequences, seq_len * n_features), jnp.float32)

    y = lstm_prediction_forward(sequences, params,
                                seq_len=seq_len, n_hidden=n_hidden)
    y = jax.block_until_ready(y)

    y_ref = reference_forward(sequences, params, seq_len, n_hidden)
    assert y.shape == (n_sequences, horizon)
    assert jnp.allclose(y, y_ref, atol=1e-4, rtol=1e-4), \
        f"max abs err {jnp.max(jnp.abs(y - y_ref))}"

    print("KERNEL_OK")
</pallas_src>

<mosaic_0001>
module attributes {stable_mosaic.version = 11 : i64} {
  func.func @fused_lstm_linear_kernel(%arg0: i32, %arg1: memref<64x4xf32, #tpu.memory_space<vmem>>, %arg2: memref<4x128xf32, #tpu.memory_space<vmem>>, %arg3: memref<32x128xf32, #tpu.memory_space<vmem>>, %arg4: memref<1x128xf32, #tpu.memory_space<vmem>>, %arg5: memref<32x1xf32, #tpu.memory_space<vmem>>, %arg6: memref<1x1xf32, #tpu.memory_space<vmem>>, %arg7: memref<8x1xf32, #tpu.memory_space<vmem>>, %arg8: memref<64x128xf32, #tpu.memory_space<vmem>>, %arg9: memref<8x32xf32, #tpu.memory_space<vmem>>) attributes {dimension_semantics = [#tpu.dimension_semantics<arbitrary>], iteration_bounds = array<i64: 1>, scalar_prefetch = 0 : i64, scratch_operands = 2 : i64, tpu.core_type = #tpu.core_type<tc>, window_params = [{pipeline_mode = #tpu.pipeline_mode<synchronous>, transform_indices = @transform_0, window_bounds = array<i64: 64, 4>}, {pipeline_mode = #tpu.pipeline_mode<synchronous>, transform_indices = @transform_1, window_bounds = array<i64: 4, 128>}, {pipeline_mode = #tpu.pipeline_mode<synchronous>, transform_indices = @transform_2, window_bounds = array<i64: 32, 128>}, {pipeline_mode = #tpu.pipeline_mode<synchronous>, transform_indices = @transform_3, window_bounds = array<i64: 1, 128>}, {pipeline_mode = #tpu.pipeline_mode<synchronous>, transform_indices = @transform_4, window_bounds = array<i64: 32, 1>}, {pipeline_mode = #tpu.pipeline_mode<synchronous>, transform_indices = @transform_5, window_bounds = array<i64: 1, 1>}, {pipeline_mode = #tpu.pipeline_mode<synchronous>, transform_indices = @transform_6, window_bounds = array<i64: 8, 1>}]} {
    %0 = tpu.iota {dimensions = array<i32: 1>} : vector<1x128xi32>
    %c64_i32 = arith.constant 64 : i32
    %1 = vector.broadcast %c64_i32 : i32 to vector<1x128xi32>
    %2 = arith.cmpi sge, %0, %1 : vector<1x128xi32>
    %c96_i32 = arith.constant 96 : i32
    %3 = vector.broadcast %c96_i32 : i32 to vector<1x128xi32>
    %4 = arith.cmpi slt, %0, %3 : vector<1x128xi32>
    %5 = arith.andi %2, %4 : vector<1x128xi1>
    %cst = arith.constant 1.000000e+00 : f32
    %cst_0 = arith.constant 5.000000e-01 : f32
    %6 = vector.broadcast %cst : f32 to vector<1x128xf32>
    %7 = vector.broadcast %cst_0 : f32 to vector<1x128xf32>
    %8 = arith.select %5, %6, %7 : vector<1x128xi1>, vector<1x128xf32>
    %9 = vector.shape_cast %5 : vector<1x128xi1> to vector<1x128xi1>
    %10 = vector.broadcast %9 : vector<1x128xi1> to vector<8x128xi1>
    %c0 = arith.constant 0 : index
    %c0_1 = arith.constant 0 : index
    %11 = vector.load %arg1[%c0, %c0_1] : memref<64x4xf32, #tpu.memory_space<vmem>>, vector<64x4xf32>
    %c0_2 = arith.constant 0 : index
    %c0_3 = arith.constant 0 : index
    %12 = vector.load %arg2[%c0_2, %c0_3] : memref<4x128xf32, #tpu.memory_space<vmem>>, vector<4x128xf32>
    %cst_4 = arith.constant dense<0.000000e+00> : vector<64x128xf32>
    %13 = tpu.matmul %11, %12, %cst_4 {dimension_numbers = #tpu.dot_dimension_numbers<[1], [0], [0], [1], [0, 0, 1, 1], [], []>} : vector<64x4xf32>, vector<4x128xf32>, vector<64x128xf32> -> vector<64x128xf32>
    %c0_5 = arith.constant 0 : index
    %c0_6 = arith.constant 0 : index
    %14 = vector.load %arg4[%c0_5, %c0_6] : memref<1x128xf32, #tpu.memory_space<vmem>>, vector<1x128xf32>
    %15 = vector.broadcast %14 : vector<1x128xf32> to vector<64x128xf32>
    %16 = arith.addf %13, %15 : vector<64x128xf32>
    %17 = vector.broadcast %8 : vector<1x128xf32> to vector<64x128xf32>
    %18 = arith.mulf %16, %17 : vector<64x128xf32>
    %c0_7 = arith.constant 0 : index
    %c0_8 = arith.constant 0 : index
    %19 = vector.load %arg8[%c0_7, %c0_8] : memref<64x128xf32, #tpu.memory_space<vmem>>, vector<64x128xf32>
    tpu.vector_store %arg8[%c0_7, %c0_8], %18 {strides = array<i32>} : memref<64x128xf32, #tpu.memory_space<vmem>>, vector<64x128xf32>,
    %c0_9 = arith.constant 0 : index
    %c0_10 = arith.constant 0 : index
    %20 = vector.load %arg3[%c0_9, %c0_10] : memref<32x128xf32, #tpu.memory_space<vmem>>, vector<32x128xf32>
    %21 = vector.broadcast %8 : vector<1x128xf32> to vector<32x128xf32>
    %22 = arith.mulf %20, %21 : vector<32x128xf32>
    %cst_11 = arith.constant 0.000000e+00 : f32
    %23 = vector.broadcast %cst_11 : f32 to vector<8x32xf32>
    %cst_12 = arith.constant 0.000000e+00 : f32
    %24 = vector.broadcast %cst_12 : f32 to vector<8x32xf32>
    %c0_i32 = arith.constant 0 : i32
    %c8_i32 = arith.constant 8 : i32
    %25 = arith.muli %c0_i32, %c8_i32 : i32
    %26 = tpu.assume_multiple %25, 8 : i32
    %27 = arith.index_cast %26 : i32 to index
    %c0_13 = arith.constant 0 : index
    %28 = vector.load %arg8[%27, %c0_13] : memref<64x128xf32, #tpu.memory_space<vmem>>, vector<8x128xf32>
    %cst_14 = arith.constant dense<0.000000e+00> : vector<8x128xf32>
    %29 = tpu.matmul %23, %22, %cst_14 {dimension_numbers = #tpu.dot_dimension_numbers<[1], [0], [0], [1], [0, 0, 1, 1], [], []>} : vector<8x32xf32>, vector<32x128xf32>, vector<8x128xf32> -> vector<8x128xf32>
    %30 = arith.addf %28, %29 : vector<8x128xf32>
    %31 = math.tanh %30 : vector<8x128xf32>
    %cst_15 = arith.constant 5.000000e-01 : f32
    %32 = vector.broadcast %cst_15 : f32 to vector<8x128xf32>
    %33 = arith.mulf %32, %31 : vector<8x128xf32>
    %cst_16 = arith.constant 5.000000e-01 : f32
    %34 = vector.broadcast %cst_16 : f32 to vector<8x128xf32>
    %35 = arith.addf %33, %34 : vector<8x128xf32>
    %36 = arith.select %10, %31, %35 : vector<8x128xi1>, vector<8x128xf32>
    %37 = vector.extract_strided_slice %36 {offsets = [0, 0], sizes = [8, 32], strides = [1, 1]} : vector<8x128xf32> to vector<8x32xf32>
    %38 = vector.extract_strided_slice %36 {offsets = [0, 32], sizes = [8, 32], strides = [1, 1]} : vector<8x128xf32> to vector<8x32xf32>
    %39 = vector.extract_strided_slice %36 {offsets = [0, 64], sizes = [8, 32], strides = [1, 1]} : vector<8x128xf32> to vector<8x32xf32>
    %40 = vector.extract_strided_slice %36 {offsets = [0, 96], sizes = [8, 32], strides = [1, 1]} : vector<8x128xf32> to vector<8x32xf32>
    %41 = arith.mulf %38, %24 : vector<8x32xf32>
    %42 = arith.mulf %37, %39 : vector<8x32xf32>
    %43 = arith.addf %41, %42 : vector<8x32xf32>
    %44 = math.tanh %43 : vector<8x32xf32>
    %45 = arith.mulf %40, %44 : vector<8x32xf32>
    %c1_i32 = arith.constant 1 : i32
    %c8_i32_17 = arith.constant 8 : i32
    %46 = arith.muli %c1_i32, %c8_i32_17 : i32
    %47 = tpu.assume_multiple %46, 8 : i32
    %48 = arith.index_cast %47 : i32 to index
    %c0_18 = arith.constant 0 : index
    %49 = vector.load %arg8[%48, %c0_18] : memref<64x128xf32, #tpu.memory_space<vmem>>, vector<8x128xf32>
    %cst_19 = arith.constant dense<0.000000e+00> : vector<8x128xf32>
    %50 = tpu.matmul %45, %22, %cst_19 {dimension_numbers = #tpu.dot_dimension_numbers<[1], [0], [0], [1], [0, 0, 1, 1], [], []>} : vector<8x32xf32>, vector<32x128xf32>, vector<8x128xf32> -> vector<8x128xf32>
    %51 = arith.addf %49, %50 : vector<8x128xf32>
    %52 = math.tanh %51 : vector<8x128xf32>
    %cst_20 = arith.constant 5.000000e-01 : f32
    %53 = vector.broadcast %cst_20 : f32 to vector<8x128xf32>
    %54 = arith.mulf %53, %52 : vector<8x128xf32>
    %cst_21 = arith.constant 5.000000e-01 : f32
    %55 = vector.broadcast %cst_21 : f32 to vector<8x128xf32>
    %56 = arith.addf %54, %55 : vector<8x128xf32>
    %57 = arith.select %10, %52, %56 : vector<8x128xi1>, vector<8x128xf32>
    %58 = vector.extract_strided_slice %57 {offsets = [0, 0], sizes = [8, 32], strides = [1, 1]} : vector<8x128xf32> to vector<8x32xf32>
    %59 = vector.extract_strided_slice %57 {offsets = [0, 32], sizes = [8, 32], strides = [1, 1]} : vector<8x128xf32> to vector<8x32xf32>
    %60 = vector.extract_strided_slice %57 {offsets = [0, 64], sizes = [8, 32], strides = [1, 1]} : vector<8x128xf32> to vector<8x32xf32>
    %61 = vector.extract_strided_slice %57 {offsets = [0, 96], sizes = [8, 32], strides = [1, 1]} : vector<8x128xf32> to vector<8x32xf32>
    %62 = arith.mulf %59, %43 : vector<8x32xf32>
    %63 = arith.mulf %58, %60 : vector<8x32xf32>
    %64 = arith.addf %62, %63 : vector<8x32xf32>
    %65 = math.tanh %64 : vector<8x32xf32>
    %66 = arith.mulf %61, %65 : vector<8x32xf32>
    %c2_i32 = arith.constant 2 : i32
    %c8_i32_22 = arith.constant 8 : i32
    %67 = arith.muli %c2_i32, %c8_i32_22 : i32
    %68 = tpu.assume_multiple %67, 8 : i32
    %69 = arith.index_cast %68 : i32 to index
    %c0_23 = arith.constant 0 : index
    %70 = vector.load %arg8[%69, %c0_23] : memref<64x128xf32, #tpu.memory_space<vmem>>, vector<8x128xf32>
    %cst_24 = arith.constant dense<0.000000e+00> : vector<8x128xf32>
    %71 = tpu.matmul %66, %22, %cst_24 {dimension_numbers = #tpu.dot_dimension_numbers<[1], [0], [0], [1], [0, 0, 1, 1], [], []>} : vector<8x32xf32>, vector<32x128xf32>, vector<8x128xf32> -> vector<8x128xf32>
    %72 = arith.addf %70, %71 : vector<8x128xf32>
    %73 = math.tanh %72 : vector<8x128xf32>
    %cst_25 = arith.constant 5.000000e-01 : f32
    %74 = vector.broadcast %cst_25 : f32 to vector<8x128xf32>
    %75 = arith.mulf %74, %73 : vector<8x128xf32>
    %cst_26 = arith.constant 5.000000e-01 : f32
    %76 = vector.broadcast %cst_26 : f32 to vector<8x128xf32>
    %77 = arith.addf %75, %76 : vector<8x128xf32>
    %78 = arith.select %10, %73, %77 : vector<8x128xi1>, vector<8x128xf32>
    %79 = vector.extract_strided_slice %78 {offsets = [0, 0], sizes = [8, 32], strides = [1, 1]} : vector<8x128xf32> to vector<8x32xf32>
    %80 = vector.extract_strided_slice %78 {offsets = [0, 32], sizes = [8, 32], strides = [1, 1]} : vector<8x128xf32> to vector<8x32xf32>
    %81 = vector.extract_strided_slice %78 {offsets = [0, 64], sizes = [8, 32], strides = [1, 1]} : vector<8x128xf32> to vector<8x32xf32>
    %82 = vector.extract_strided_slice %78 {offsets = [0, 96], sizes = [8, 32], strides = [1, 1]} : vector<8x128xf32> to vector<8x32xf32>
    %83 = arith.mulf %80, %64 : vector<8x32xf32>
    %84 = arith.mulf %79, %81 : vector<8x32xf32>
    %85 = arith.addf %83, %84 : vector<8x32xf32>
    %86 = math.tanh %85 : vector<8x32xf32>
    %87 = arith.mulf %82, %86 : vector<8x32xf32>
    %c3_i32 = arith.constant 3 : i32
    %c8_i32_27 = arith.constant 8 : i32
    %88 = arith.muli %c3_i32, %c8_i32_27 : i32
    %89 = tpu.assume_multiple %88, 8 : i32
    %90 = arith.index_cast %89 : i32 to index
    %c0_28 = arith.constant 0 : index
    %91 = vector.load %arg8[%90, %c0_28] : memref<64x128xf32, #tpu.memory_space<vmem>>, vector<8x128xf32>
    %cst_29 = arith.constant dense<0.000000e+00> : vector<8x128xf32>
    %92 = tpu.matmul %87, %22, %cst_29 {dimension_numbers = #tpu.dot_dimension_numbers<[1], [0], [0], [1], [0, 0, 1, 1], [], []>} : vector<8x32xf32>, vector<32x128xf32>, vector<8x128xf32> -> vector<8x128xf32>
    %93 = arith.addf %91, %92 : vector<8x128xf32>
    %94 = math.tanh %93 : vector<8x128xf32>
    %cst_30 = arith.constant 5.000000e-01 : f32
    %95 = vector.broadcast %cst_30 : f32 to vector<8x128xf32>
    %96 = arith.mulf %95, %94 : vector<8x128xf32>
    %cst_31 = arith.constant 5.000000e-01 : f32
    %97 = vector.broadcast %cst_31 : f32 to vector<8x128xf32>
    %98 = arith.addf %96, %97 : vector<8x128xf32>
    %99 = arith.select %10, %94, %98 : vector<8x128xi1>, vector<8x128xf32>
    %100 = vector.extract_strided_slice %99 {offsets = [0, 0], sizes = [8, 32], strides = [1, 1]} : vector<8x128xf32> to vector<8x32xf32>
    %101 = vector.extract_strided_slice %99 {offsets = [0, 32], sizes = [8, 32], strides = [1, 1]} : vector<8x128xf32> to vector<8x32xf32>
    %102 = vector.extract_strided_slice %99 {offsets = [0, 64], sizes = [8, 32], strides = [1, 1]} : vector<8x128xf32> to vector<8x32xf32>
    %103 = vector.extract_strided_slice %99 {offsets = [0, 96], sizes = [8, 32], strides = [1, 1]} : vector<8x128xf32> to vector<8x32xf32>
    %104 = arith.mulf %101, %85 : vector<8x32xf32>
    %105 = arith.mulf %100, %102 : vector<8x32xf32>
    %106 = arith.addf %104, %105 : vector<8x32xf32>
    %107 = math.tanh %106 : vector<8x32xf32>
    %108 = arith.mulf %103, %107 : vector<8x32xf32>
    %c4_i32 = arith.constant 4 : i32
    %c8_i32_32 = arith.constant 8 : i32
    %109 = arith.muli %c4_i32, %c8_i32_32 : i32
    %110 = tpu.assume_multiple %109, 8 : i32
    %111 = arith.index_cast %110 : i32 to index
    %c0_33 = arith.constant 0 : index
    %112 = vector.load %arg8[%111, %c0_33] : memref<64x128xf32, #tpu.memory_space<vmem>>, vector<8x128xf32>
    %cst_34 = arith.constant dense<0.000000e+00> : vector<8x128xf32>
    %113 = tpu.matmul %108, %22, %cst_34 {dimension_numbers = #tpu.dot_dimension_numbers<[1], [0], [0], [1], [0, 0, 1, 1], [], []>} : vector<8x32xf32>, vector<32x128xf32>, vector<8x128xf32> -> vector<8x128xf32>
    %114 = arith.addf %112, %113 : vector<8x128xf32>
    %115 = math.tanh %114 : vector<8x128xf32>
    %cst_35 = arith.constant 5.000000e-01 : f32
    %116 = vector.broadcast %cst_35 : f32 to vector<8x128xf32>
    %117 = arith.mulf %116, %115 : vector<8x128xf32>
    %cst_36 = arith.constant 5.000000e-01 : f32
    %118 = vector.broadcast %cst_36 : f32 to vector<8x128xf32>
    %119 = arith.addf %117, %118 : vector<8x128xf32>
    %120 = arith.select %10, %115, %119 : vector<8x128xi1>, vector<8x128xf32>
    %121 = vector.extract_strided_slice %120 {offsets = [0, 0], sizes = [8, 32], strides = [1, 1]} : vector<8x128xf32> to vector<8x32xf32>
    %122 = vector.extract_strided_slice %120 {offsets = [0, 32], sizes = [8, 32], strides = [1, 1]} : vector<8x128xf32> to vector<8x32xf32>
    %123 = vector.extract_strided_slice %120 {offsets = [0, 64], sizes = [8, 32], strides = [1, 1]} : vector<8x128xf32> to vector<8x32xf32>
    %124 = vector.extract_strided_slice %120 {offsets = [0, 96], sizes = [8, 32], strides = [1, 1]} : vector<8x128xf32> to vector<8x32xf32>
    %125 = arith.mulf %122, %106 : vector<8x32xf32>
    %126 = arith.mulf %121, %123 : vector<8x32xf32>
    %127 = arith.addf %125, %126 : vector<8x32xf32>
    %128 = math.tanh %127 : vector<8x32xf32>
    %129 = arith.mulf %124, %128 : vector<8x32xf32>
    %c5_i32 = arith.constant 5 : i32
    %c8_i32_37 = arith.constant 8 : i32
    %130 = arith.muli %c5_i32, %c8_i32_37 : i32
    %131 = tpu.assume_multiple %130, 8 : i32
    %132 = arith.index_cast %131 : i32 to index
    %c0_38 = arith.constant 0 : index
    %133 = vector.load %arg8[%132, %c0_38] : memref<64x128xf32, #tpu.memory_space<vmem>>, vector<8x128xf32>
    %cst_39 = arith.constant dense<0.000000e+00> : vector<8x128xf32>
    %134 = tpu.matmul %129, %22, %cst_39 {dimension_numbers = #tpu.dot_dimension_numbers<[1], [0], [0], [1], [0, 0, 1, 1], [], []>} : vector<8x32xf32>, vector<32x128xf32>, vector<8x128xf32> -> vector<8x128xf32>
    %135 = arith.addf %133, %134 : vector<8x128xf32>
    %136 = math.tanh %135 : vector<8x128xf32>
    %cst_40 = arith.constant 5.000000e-01 : f32
    %137 = vector.broadcast %cst_40 : f32 to vector<8x128xf32>
    %138 = arith.mulf %137, %136 : vector<8x128xf32>
    %cst_41 = arith.constant 5.000000e-01 : f32
    %139 = vector.broadcast %cst_41 : f32 to vector<8x128xf32>
    %140 = arith.addf %138, %139 : vector<8x128xf32>
    %141 = arith.select %10, %136, %140 : vector<8x128xi1>, vector<8x128xf32>
    %142 = vector.extract_strided_slice %141 {offsets = [0, 0], sizes = [8, 32], strides = [1, 1]} : vector<8x128xf32> to vector<8x32xf32>
    %143 = vector.extract_strided_slice %141 {offsets = [0, 32], sizes = [8, 32], strides = [1, 1]} : vector<8x128xf32> to vector<8x32xf32>
    %144 = vector.extract_strided_slice %141 {offsets = [0, 64], sizes = [8, 32], strides = [1, 1]} : vector<8x128xf32> to vector<8x32xf32>
    %145 = vector.extract_strided_slice %141 {offsets = [0, 96], sizes = [8, 32], strides = [1, 1]} : vector<8x128xf32> to vector<8x32xf32>
    %146 = arith.mulf %143, %127 : vector<8x32xf32>
    %147 = arith.mulf %142, %144 : vector<8x32xf32>
    %148 = arith.addf %146, %147 : vector<8x32xf32>
    %149 = math.tanh %148 : vector<8x32xf32>
    %150 = arith.mulf %145, %149 : vector<8x32xf32>
    %c6_i32 = arith.constant 6 : i32
    %c8_i32_42 = arith.constant 8 : i32
    %151 = arith.muli %c6_i32, %c8_i32_42 : i32
    %152 = tpu.assume_multiple %151, 8 : i32
    %153 = arith.index_cast %152 : i32 to index
    %c0_43 = arith.constant 0 : index
    %154 = vector.load %arg8[%153, %c0_43] : memref<64x128xf32, #tpu.memory_space<vmem>>, vector<8x128xf32>
    %cst_44 = arith.constant dense<0.000000e+00> : vector<8x128xf32>
    %155 = tpu.matmul %150, %22, %cst_44 {dimension_numbers = #tpu.dot_dimension_numbers<[1], [0], [0], [1], [0, 0, 1, 1], [], []>} : vector<8x32xf32>, vector<32x128xf32>, vector<8x128xf32> -> vector<8x128xf32>
    %156 = arith.addf %154, %155 : vector<8x128xf32>
    %157 = math.tanh %156 : vector<8x128xf32>
    %cst_45 = arith.constant 5.000000e-01 : f32
    %158 = vector.broadcast %cst_45 : f32 to vector<8x128xf32>
    %159 = arith.mulf %158, %157 : vector<8x128xf32>
    %cst_46 = arith.constant 5.000000e-01 : f32
    %160 = vector.broadcast %cst_46 : f32 to vector<8x128xf32>
    %161 = arith.addf %159, %160 : vector<8x128xf32>
    %162 = arith.select %10, %157, %161 : vector<8x128xi1>, vector<8x128xf32>
    %163 = vector.extract_strided_slice %162 {offsets = [0, 0], sizes = [8, 32], strides = [1, 1]} : vector<8x128xf32> to vector<8x32xf32>
    %164 = vector.extract_strided_slice %162 {offsets = [0, 32], sizes = [8, 32], strides = [1, 1]} : vector<8x128xf32> to vector<8x32xf32>
    %165 = vector.extract_strided_slice %162 {offsets = [0, 64], sizes = [8, 32], strides = [1, 1]} : vector<8x128xf32> to vector<8x32xf32>
    %166 = vector.extract_strided_slice %162 {offsets = [0, 96], sizes = [8, 32], strides = [1, 1]} : vector<8x128xf32> to vector<8x32xf32>
    %167 = arith.mulf %164, %148 : vector<8x32xf32>
    %168 = arith.mulf %163, %165 : vector<8x32xf32>
    %169 = arith.addf %167, %168 : vector<8x32xf32>
    %170 = math.tanh %169 : vector<8x32xf32>
    %171 = arith.mulf %166, %170 : vector<8x32xf32>
    %c7_i32 = arith.constant 7 : i32
    %c7_i32_47 = arith.constant 7 : i32
    %c8_i32_48 = arith.constant 8 : i32
    %172 = arith.muli %c7_i32_47, %c8_i32_48 : i32
    %173 = tpu.assume_multiple %172, 8 : i32
    %174 = arith.index_cast %173 : i32 to index
    %c0_49 = arith.constant 0 : index
    %175 = vector.load %arg8[%174, %c0_49] : memref<64x128xf32, #tpu.memory_space<vmem>>, vector<8x128xf32>
    %cst_50 = arith.constant dense<0.000000e+00> : vector<8x128xf32>
    %176 = tpu.matmul %171, %22, %cst_50 {dimension_numbers = #tpu.dot_dimension_numbers<[1], [0], [0], [1], [0, 0, 1, 1], [], []>} : vector<8x32xf32>, vector<32x128xf32>, vector<8x128xf32> -> vector<8x128xf32>
    %177 = arith.addf %175, %176 : vector<8x128xf32>
    %178 = math.tanh %177 : vector<8x128xf32>
    %cst_51 = arith.constant 5.000000e-01 : f32
    %179 = vector.broadcast %cst_51 : f32 to vector<8x128xf32>
    %180 = arith.mulf %179, %178 : vector<8x128xf32>
    %cst_52 = arith.constant 5.000000e-01 : f32
    %181 = vector.broadcast %cst_52 : f32 to vector<8x128xf32>
    %182 = arith.addf %180, %181 : vector<8x128xf32>
    %183 = arith.select %10, %178, %182 : vector<8x128xi1>, vector<8x128xf32>
    %184 = vector.extract_strided_slice %183 {offsets = [0, 0], sizes = [8, 32], strides = [1, 1]} : vector<8x128xf32> to vector<8x32xf32>
    %185 = vector.extract_strided_slice %183 {offsets = [0, 32], sizes = [8, 32], strides = [1, 1]} : vector<8x128xf32> to vector<8x32xf32>
    %186 = vector.extract_strided_slice %183 {offsets = [0, 64], sizes = [8, 32], strides = [1, 1]} : vector<8x128xf32> to vector<8x32xf32>
    %187 = vector.extract_strided_slice %183 {offsets = [0, 96], sizes = [8, 32], strides = [1, 1]} : vector<8x128xf32> to vector<8x32xf32>
    %188 = arith.mulf %185, %169 : vector<8x32xf32>
    %189 = arith.mulf %184, %186 : vector<8x32xf32>
    %190 = arith.addf %188, %189 : vector<8x32xf32>
    %191 = math.tanh %190 : vector<8x32xf32>
    %192 = arith.mulf %187, %191 : vector<8x32xf32>
    %c7_i32_53 = arith.constant 7 : i32
    %193 = arith.subi %c7_i32_47, %c7_i32_53 : i32
    %c8_i32_54 = arith.constant 8 : i32
    %194 = arith.muli %193, %c8_i32_54 : i32
    %195 = tpu.assume_multiple %194, 8 : i32
    %196 = arith.index_cast %195 : i32 to index
    %c0_55 = arith.constant 0 : index
    %197 = vector.load %arg9[%196, %c0_55] : memref<8x32xf32, #tpu.memory_space<vmem>>, vector<8x32xf32>
    tpu.vector_store %arg9[%196, %c0_55], %192 {strides = array<i32>} : memref<8x32xf32, #tpu.memory_space<vmem>>, vector<8x32xf32>,
    %c1_i32_56 = arith.constant 1 : i32
    %c0_57 = arith.constant 0 : index
    %c0_58 = arith.constant 0 : index
    %198 = vector.load %arg9[%c0_57, %c0_58] : memref<8x32xf32, #tpu.memory_space<vmem>>, vector<8x32xf32>
    %c0_59 = arith.constant 0 : index
    %c0_60 = arith.constant 0 : index
    %199 = vector.load %arg5[%c0_59, %c0_60] : memref<32x1xf32, #tpu.memory_space<vmem>>, vector<32x1xf32>
    %cst_61 = arith.constant dense<0.000000e+00> : vector<8x1xf32>
    %200 = tpu.matmul %198, %199, %cst_61 {dimension_numbers = #tpu.dot_dimension_numbers<[1], [0], [0], [1], [0, 0, 1, 1], [], []>} : vector<8x32xf32>, vector<32x1xf32>, vector<8x1xf32> -> vector<8x1xf32>
    %c0_62 = arith.constant 0 : index
    %c0_63 = arith.constant 0 : index
    %201 = vector.load %arg6[%c0_62, %c0_63] : memref<1x1xf32, #tpu.memory_space<vmem>>, vector<1x1xf32>
    %202 = vector.broadcast %201 : vector<1x1xf32> to vector<8x1xf32>
    %203 = arith.addf %200, %202 : vector<8x1xf32>
    %c0_64 = arith.constant 0 : index
    %c0_65 = arith.constant 0 : index
    %204 = vector.load %arg7[%c0_64, %c0_65] : memref<8x1xf32, #tpu.memory_space<vmem>>, vector<8x1xf32>
    tpu.vector_store %arg7[%c0_64, %c0_65], %203 {strides = array<i32>} : memref<8x1xf32, #tpu.memory_space<vmem>>, vector<8x1xf32>,
    return
  }
  func.func @transform_0(%arg0: i32) -> (i32, i32) {
    %c0_i32 = arith.constant 0 : i32
    %c0_i32_0 = arith.constant 0 : i32
    %c0_i32_1 = arith.constant 0 : i32
    return %c0_i32, %c0_i32_0 : i32, i32
  }
  func.func @transform_1(%arg0: i32) -> (i32, i32) {
    %c0_i32 = arith.constant 0 : i32
    %c0_i32_0 = arith.constant 0 : i32
    %c0_i32_1 = arith.constant 0 : i32
    return %c0_i32, %c0_i32_0 : i32, i32
  }
  func.func @transform_2(%arg0: i32) -> (i32, i32) {
    %c0_i32 = arith.constant 0 : i32
    %c0_i32_0 = arith.constant 0 : i32
    %c0_i32_1 = arith.constant 0 : i32
    return %c0_i32, %c0_i32_0 : i32, i32
  }
  func.func @transform_3(%arg0: i32) -> (i32, i32) {
    %c0_i32 = arith.constant 0 : i32
    %c0_i32_0 = arith.constant 0 : i32
    %c0_i32_1 = arith.constant 0 : i32
    return %c0_i32, %c0_i32_0 : i32, i32
  }
  func.func @transform_4(%arg0: i32) -> (i32, i32) {
    %c0_i32 = arith.constant 0 : i32
    %c0_i32_0 = arith.constant 0 : i32
    %c0_i32_1 = arith.constant 0 : i32
    return %c0_i32, %c0_i32_0 : i32, i32
  }
  func.func @transform_5(%arg0: i32) -> (i32, i32) {
    %c0_i32 = arith.constant 0 : i32
    %c0_i32_0 = arith.constant 0 : i32
    %c0_i32_1 = arith.constant 0 : i32
    return %c0_i32, %c0_i32_0 : i32, i32
  }
  func.func @transform_6(%arg0: i32) -> (i32, i32) {
    %c0_i32 = arith.constant 0 : i32
    %c0_i32_0 = arith.constant 0 : i32
    %c0_i32_1 = arith.constant 0 : i32
    return %c0_i32, %c0_i32_0 : i32, i32
  }
}

</mosaic_0001>

<llo_original>
// kernel: lstm_prediction_forward.1
$region0: #{lstm_prediction_forward.1}
  #allocation0 [shape = 'u32[]', space=smem, size = 0x4, offset = 0x4, fixed_abs, tag = 'smem constant byte address 0x4 - core index']
  #allocation1 [shape = 'u32[144,128]{1,0:T(1,128)}', space=vmem, size = 0x12000, scoped, tag = 'internal scratch']
  #allocation2 [shape = 'f32[64,128]{1,0:T(8,128)}', space=vmem, size = 0x8000, scoped, tag = 'scratch operand']
  #allocation3 [shape = 'f32[8,32]{1,0:T(8,128)}', space=vmem, size = 0x1000, scoped, tag = 'scratch operand']
  #allocation4 [shape = 'f32[1,1]{1,0:T(1,128)S(1)}', space=vmem, size = 0x200, scoped, tag = 'scoped memory for lstm_prediction_forward.1']
  %s0 = inlined_call_operand.vmem [shape: f32[64,4], index: 0, kind: input, shape index: {}]
  %s1 = inlined_call_operand.vmem [shape: f32[4,128], index: 1, kind: input, shape index: {}]
  %s2 = inlined_call_operand.vmem [shape: f32[32,128], index: 2, kind: input, shape index: {}]
  %s3 = inlined_call_operand.vmem [shape: f32[1,128], index: 3, kind: input, shape index: {}]
  %s4 = inlined_call_operand.vmem [shape: f32[32,1], index: 4, kind: input, shape index: {}]
  %s5 = inlined_call_operand.<no memory space> [shape: f32[1,1], index: 5, kind: input, shape index: {}]
  %s6 = inlined_call_operand.vmem [shape: f32[8,1], index: 6, kind: output, shape index: {}]
  %s7 = sld [smem:[#allocation0]]
  $region34: #{lstm_prediction_forward.1} parent=0
    _
  %s9 = ssub.s32 1, %s7
  %s10 = scalar_select 0, %s9, %s7
  %v11 = vstv %s5
  %12 = vst [vmem:[#allocation4] sm:$0x1] %v11
  // Predicated region
  $region2: #{lstm_prediction_forward.1} parent=0 // pred_check
    _
  $region3: #{lstm_prediction_forward.1} parent=0 // pred_check_branch
    %14 = sbr.rel (0) target = $region5
  $region4: #{lstm_prediction_forward.1} parent=0 // pred_region
    _
  $region5: #{lstm_prediction_forward.1} parent=0 // pred_fallthru
    _
  // Predicated region
  $region6: #{lstm_prediction_forward.1} parent=0 // pred_check
    _
  $region7: #{lstm_prediction_forward.1} parent=0 // pred_check_branch
    %16 = sbr.rel (0) target = $region9
  $region8: #{lstm_prediction_forward.1} parent=0 // pred_region
    _
  $region9: #{lstm_prediction_forward.1} parent=0 // pred_fallthru
    _
  // Predicated region
  $region10: #{lstm_prediction_forward.1} parent=0 // pred_check
    _
  $region11: #{lstm_prediction_forward.1} parent=0 // pred_check_branch
    %18 = sbr.rel (0) target = $region13
  $region12: #{lstm_prediction_forward.1} parent=0 // pred_region
    _
  $region13: #{lstm_prediction_forward.1} parent=0 // pred_fallthru
    _
  // Predicated region
  $region14: #{lstm_prediction_forward.1} parent=0 // pred_check
    _
  $region15: #{lstm_prediction_forward.1} parent=0 // pred_check_branch
    %20 = sbr.rel (0) target = $region17
  $region16: #{lstm_prediction_forward.1} parent=0 // pred_region
    _
  $region17: #{lstm_prediction_forward.1} parent=0 // pred_fallthru
    _
  // Predicated region
  $region18: #{lstm_prediction_forward.1} parent=0 // pred_check
    _
  $region19: #{lstm_prediction_forward.1} parent=0 // pred_check_branch
    %22 = sbr.rel (0) target = $region21
  $region20: #{lstm_prediction_forward.1} parent=0 // pred_region
    _
  $region21: #{lstm_prediction_forward.1} parent=0 // pred_fallthru
    _
  // Predicated region
  $region22: #{lstm_prediction_forward.1} parent=0 // pred_check
    _
  $region23: #{lstm_prediction_forward.1} parent=0 // pred_check_branch
    %24 = sbr.rel (0) target = $region25
  $region24: #{lstm_prediction_forward.1} parent=0 // pred_region
    _
  $region25: #{lstm_prediction_forward.1} parent=0 // pred_fallthru
    _
  %v25 = vlaneseq
  %v26 = vand.u32 %v25, 127
  %vm27 = vcmp.ge.s32.totalorder %v26, 64
  %vm28 = vcmp.lt.s32.totalorder %v26, 96
  %vm29 = vmand %vm27, %vm28
  %v30 = vsel %vm29, 1.0, 0.5
  %v31 = vsel %vm29, 1, 0
  %vm32 = vcmp.eq.s32.totalorder %v31, 1
  %v33 = vld [vmem:[%s0] sm:$0xff]
  %v34 = vld [vmem:[%s0 + $0x8] sm:$0xff]
  %v35 = vld [vmem:[%s0 + $0x10] sm:$0xff]
  %v36 = vld [vmem:[%s0 + $0x18] sm:$0xff]
  %v37 = vld [vmem:[%s0 + $0x20] sm:$0xff]
  %v38 = vld [vmem:[%s0 + $0x28] sm:$0xff]
  %v39 = vld [vmem:[%s0 + $0x30] sm:$0xff]
  %v40 = vld [vmem:[%s0 + $0x38] sm:$0xff]
  %v41 = vld [vmem:[%s1] sm:$0xf]
  %v42 = vld [vmem:[%s3] sm:$0x1]
  %v44 = vlaneseq
  %v45 = vshrl.u32 %v44, 7
  %v46 = vsub.s32 0, %v45
  %v47 = vrot.slane %v42, %v46
  %vm49 = vcmask 31744
  %v51 = vsel %vm49, %v33, 0
  %v54 = vsel %vm49, %v34, 0
  %v57 = vsel %vm49, %v35, 0
  %v60 = vsel %vm49, %v36, 0
  %v63 = vsel %vm49, %v37, 0
  %v66 = vsel %vm49, %v38, 0
  %v69 = vsel %vm49, %v39, 0
  %v72 = vsel %vm49, %v40, 0
  %vm74 = vcmask 1043456
  %v76 = vsel %vm74, %v41, 0
  %78 = vmatprep.subr.mxu0 0.0
  %79 = vmatpush1.msra.mxu0 0.0
  %80 = vmatprep.subr.mxu0 0.0
  %81 = vmatpush1.msra.mxu0 0.0
  %82 = vmatprep.subr.mxu0 0.0
  %83 = vmatpush1.msra.mxu0 0.0
  %84 = vmatprep.subr.mxu0 0.0
  %85 = vmatpush1.msra.mxu0 0.0
  %86 = vmatprep.subr.mxu0 0.0
  %87 = vmatpush1.msra.mxu0 0.0
  %88 = vmatprep.subr.mxu0 0.0
  %89 = vmatpush1.msra.mxu0 0.0
  %90 = vmatprep.subr.mxu0 0.0
  %91 = vmatpush1.msra.mxu0 0.0
  %92 = vmatprep.subr.mxu0 0.0
  %93 = vmatpush1.msra.mxu0 0.0
  %94 = vmatprep.subr.mxu0 0.0
  %95 = vmatpush1.msra.mxu0 0.0
  %96 = vmatprep.subr.mxu0 0.0
  %97 = vmatpush1.msra.mxu0 0.0
  %98 = vmatprep.subr.mxu0 0.0
  %99 = vmatpush1.msra.mxu0 0.0
  %100 = vmatprep.subr.mxu0 0.0
  %101 = vmatpush1.msra.mxu0 0.0
  %102 = vmatprep.subr.mxu0 0.0
  %103 = vmatpush1.msra.mxu0 0.0
  %104 = vmatprep.subr.mxu0 0.0
  %105 = vmatpush1.msra.mxu0 0.0
  %106 = vmatprep.subr.mxu0 0.0
  %107 = vmatpush1.msra.mxu0 0.0
  %108 = vmatprep.subr.mxu0 0.0
  %109 = vmatpush1.msra.mxu0 %v76
  %110 = vmatprep.subr.mxu0 0.0
  %111 = vmatpush2.msra.mxu0 0.0
  %112 = vmatprep.subr.mxu0 0.0
  %113 = vmatpush2.msra.mxu0 0.0
  %114 = vmatprep.subr.mxu0 0.0
  %115 = vmatpush2.msra.mxu0 0.0
  %116 = vmatprep.subr.mxu0 0.0
  %117 = vmatpush2.msra.mxu0 0.0
  %118 = vmatprep.subr.mxu0 0.0
  %119 = vmatpush2.msra.mxu0 0.0
  %120 = vmatprep.subr.mxu0 0.0
  %121 = vmatpush2.msra.mxu0 0.0
  %122 = vmatprep.subr.mxu0 0.0
  %123 = vmatpush2.msra.mxu0 0.0
  %124 = vmatprep.subr.mxu0 0.0
  %125 = vmatpush2.msra.mxu0 0.0
  %126 = vmatprep.subr.mxu0 0.0
  %127 = vmatpush2.msra.mxu0 0.0
  %128 = vmatprep.subr.mxu0 0.0
  %129 = vmatpush2.msra.mxu0 0.0
  %130 = vmatprep.subr.mxu0 0.0
  %131 = vmatpush2.msra.mxu0 0.0
  %132 = vmatprep.subr.mxu0 0.0
  %133 = vmatpush2.msra.mxu0 0.0
  %134 = vmatprep.subr.mxu0 0.0
  %135 = vmatpush2.msra.mxu0 0.0
  %136 = vmatprep.subr.mxu0 0.0
  %137 = vmatpush2.msra.mxu0 0.0
  %138 = vmatprep.subr.mxu0 0.0
  %139 = vmatpush2.msra.mxu0 0.0
  %140 = vmatprep.subr.mxu0 0.0
  %141 = vmatpush2.msra.mxu0 0.0
  %142 = vmatprep.mubr.f32.mxu0 0.0
  %143 = vmatmul.mubr.f32.gmra.mxu0 %v51
  %v144 = vpop.f32.mrf.mxu0
  %v145 = vadd.f32 %v47, %v144
  %v146 = vpop.f32.mrf.mxu0
  %147 = vmatprep.mubr.f32.mxu0 0.0
  %148 = vmatmul.mubr.f32.gmra.mxu0 %v54
  %v149 = vpop.f32.mrf.mxu0
  %v150 = vadd.f32 %v47, %v149
  %v151 = vpop.f32.mrf.mxu0
  %152 = vmatprep.mubr.f32.mxu0 0.0
  %153 = vmatmul.mubr.f32.gmra.mxu0 %v57
  %v154 = vpop.f32.mrf.mxu0
  %v155 = vadd.f32 %v47, %v154
  %v156 = vpop.f32.mrf.mxu0
  %157 = vmatprep.mubr.f32.mxu0 0.0
  %158 = vmatmul.mubr.f32.gmra.mxu0 %v60
  %v159 = vpop.f32.mrf.mxu0
  %v160 = vadd.f32 %v47, %v159
  %v161 = vpop.f32.mrf.mxu0
  %162 = vmatprep.mubr.f32.mxu0 0.0
  %163 = vmatmul.mubr.f32.gmra.mxu0 %v63
  %v164 = vpop.f32.mrf.mxu0
  %v165 = vadd.f32 %v47, %v164
  %v166 = vpop.f32.mrf.mxu0
  %167 = vmatprep.mubr.f32.mxu0 0.0
  %168 = vmatmul.mubr.f32.gmra.mxu0 %v66
  %v169 = vpop.f32.mrf.mxu0
  %v170 = vadd.f32 %v47, %v169
  %v171 = vpop.f32.mrf.mxu0
  %172 = vmatprep.mubr.f32.mxu0 0.0
  %173 = vmatmul.mubr.f32.gmra.mxu0 %v69
  %v174 = vpop.f32.mrf.mxu0
  %v175 = vadd.f32 %v47, %v174
  %v176 = vpop.f32.mrf.mxu0
  %177 = vmatprep.mubr.f32.mxu0 0.0
  %178 = vmatmul.mubr.f32.gmra.mxu0 %v72
  %v179 = vpop.f32.mrf.mxu0
  %v180 = vadd.f32 %v47, %v179
  %v181 = vpop.f32.mrf.mxu0
  %182 = vdwg.mxu0
  %v183 = vmul.f32 %v145, %v30
  %v184 = vmul.f32 %v150, %v30
  %v185 = vmul.f32 %v155, %v30
  %v186 = vmul.f32 %v160, %v30
  %v187 = vmul.f32 %v165, %v30
  %v188 = vmul.f32 %v170, %v30
  %v189 = vmul.f32 %v175, %v30
  %v190 = vmul.f32 %v180, %v30
  %191 = vst [vmem:[#allocation2] sm:$0xff] %v183
  %192 = vst [vmem:[#allocation2 + $0x8] sm:$0xff] %v184
  %193 = vst [vmem:[#allocation2 + $0x10] sm:$0xff] %v185
  %194 = vst [vmem:[#allocation2 + $0x18] sm:$0xff] %v186
  %195 = vst [vmem:[#allocation2 + $0x20] sm:$0xff] %v187
  %196 = vst [vmem:[#allocation2 + $0x28] sm:$0xff] %v188
  %197 = vst [vmem:[#allocation2 + $0x30] sm:$0xff] %v189
  %198 = vst [vmem:[#allocation2 + $0x38] sm:$0xff] %v190
  %v199 = vld [vmem:[%s2] sm:$0xff]
  %v200 = vld [vmem:[%s2 + $0x8] sm:$0xff]
  %v201 = vld [vmem:[%s2 + $0x10] sm:$0xff]
  %v202 = vld [vmem:[%s2 + $0x18] sm:$0xff]
  %v203 = vmul.f32 %v199, %v30
  %v204 = vmul.f32 %v200, %v30
  %v205 = vmul.f32 %v201, %v30
  %v206 = vmul.f32 %v202, %v30
  %v207 = vld [vmem:[#allocation2] sm:$0xff]
  %vm208 = vcmask 261120
  %v210 = vsel %vm208, 0.0, 0
  %212 = vmatprep.subr.mxu0 0.0
  %213 = vmatpush1.msra.mxu0 0.0
  %214 = vmatprep.subr.mxu0 0.0
  %215 = vmatpush1.msra.mxu0 0.0
  %216 = vmatprep.subr.mxu0 0.0
  %217 = vmatpush1.msra.mxu0 0.0
  %218 = vmatprep.subr.mxu0 0.0
  %219 = vmatpush1.msra.mxu0 0.0
  %220 = vmatprep.subr.mxu0 0.0
  %221 = vmatpush1.msra.mxu0 0.0
  %222 = vmatprep.subr.mxu0 0.0
  %223 = vmatpush1.msra.mxu0 0.0
  %224 = vmatprep.subr.mxu0 0.0
  %225 = vmatpush1.msra.mxu0 0.0
  %226 = vmatprep.subr.mxu0 0.0
  %227 = vmatpush1.msra.mxu0 0.0
  %228 = vmatprep.subr.mxu0 0.0
  %229 = vmatpush1.msra.mxu0 0.0
  %230 = vmatprep.subr.mxu0 0.0
  %231 = vmatpush1.msra.mxu0 0.0
  %232 = vmatprep.subr.mxu0 0.0
  %233 = vmatpush1.msra.mxu0 0.0
  %234 = vmatprep.subr.mxu0 0.0
  %235 = vmatpush1.msra.mxu0 0.0
  %236 = vmatprep.subr.mxu0 0.0
  %237 = vmatpush1.msra.mxu0 %v206
  %238 = vmatprep.subr.mxu0 0.0
  %239 = vmatpush1.msra.mxu0 %v205
  %240 = vmatprep.subr.mxu0 0.0
  %241 = vmatpush1.msra.mxu0 %v204
  %242 = vmatprep.subr.mxu0 0.0
  %243 = vmatpush1.msra.mxu0 %v203
  %244 = vmatprep.subr.mxu0 0.0
  %245 = vmatpush2.msra.mxu0 0.0
  %246 = vmatprep.subr.mxu0 0.0
  %247 = vmatpush2.msra.mxu0 0.0
  %248 = vmatprep.subr.mxu0 0.0
  %249 = vmatpush2.msra.mxu0 0.0
  %250 = vmatprep.subr.mxu0 0.0
  %251 = vmatpush2.msra.mxu0 0.0
  %252 = vmatprep.subr.mxu0 0.0
  %253 = vmatpush2.msra.mxu0 0.0
  %254 = vmatprep.subr.mxu0 0.0
  %255 = vmatpush2.msra.mxu0 0.0
  %256 = vmatprep.subr.mxu0 0.0
  %257 = vmatpush2.msra.mxu0 0.0
  %258 = vmatprep.subr.mxu0 0.0
  %259 = vmatpush2.msra.mxu0 0.0
  %260 = vmatprep.subr.mxu0 0.0
  %261 = vmatpush2.msra.mxu0 0.0
  %262 = vmatprep.subr.mxu0 0.0
  %263 = vmatpush2.msra.mxu0 0.0
  %264 = vmatprep.subr.mxu0 0.0
  %265 = vmatpush2.msra.mxu0 0.0
  %266 = vmatprep.subr.mxu0 0.0
  %267 = vmatpush2.msra.mxu0 0.0
  %268 = vmatprep.subr.mxu0 0.0
  %269 = vmatpush2.msra.mxu0 0.0
  %270 = vmatprep.subr.mxu0 0.0
  %271 = vmatpush2.msra.mxu0 0.0
  %272 = vmatprep.subr.mxu0 0.0
  %273 = vmatpush2.msra.mxu0 0.0
  %274 = vmatprep.subr.mxu0 0.0
  %275 = vmatpush2.msra.mxu0 0.0
  %276 = vmatprep.mubr.f32.mxu0 0.0
  %277 = vmatmul.mubr.f32.gmra.mxu0 %v210
  %v278 = vpop.f32.mrf.mxu0
  %v279 = vadd.f32 0.0, %v278
  %v280 = vpop.f32.mrf.mxu0
  %281 = vdwg.mxu0
  %v282 = vadd.f32 %v207, %v279
  %v283 = vtanh.pop %v282
  %v284 = vmul.f32 %v283, 0.5
  %v285 = vadd.f32 %v284, 0.5
  %v286 = vsel %vm32, %v283, %v285
  %v287 = vmul.f32 %v286, 0.0
  %289 = vrot.lane.b32.xlu0 %v286, 64
  %v290 = vpop.permute.xlu0 %289
  %v292 = vmul.f32 %v286, %v290
  %294 = vrot.lane.b32.xlu0 %v292, 32
  %v295 = vpop.permute.xlu0 %294
  %v297 = vadd.f32 %v287, %v295
  %v298 = vtanh.pop %v297
  %300 = vrot.lane.b32.xlu0 %v298, 64
  %v301 = vpop.permute.xlu0 %300
  %v303 = vmul.f32 %v286, %v301
  %s304 = scalar_lea.vmem [#allocation2], 8
  %v305 = vld [vmem:[%s304] sm:$0xff]
  %307 = vrot.lane.b32.xlu0 %v303, 32
  %v308 = vpop.permute.xlu0 %307
  %v309 = vsel %vm208, %v308, 0
  %311 = vmatprep.subr.mxu0 0.0
  %312 = vmatpush1.msra.mxu0 0.0
  %313 = vmatprep.subr.mxu0 0.0
  %314 = vmatpush1.msra.mxu0 0.0
  %315 = vmatprep.subr.mxu0 0.0
  %316 = vmatpush1.msra.mxu0 0.0
  %317 = vmatprep.subr.mxu0 0.0
  %318 = vmatpush1.msra.mxu0 0.0
  %319 = vmatprep.subr.mxu0 0.0
  %320 = vmatpush1.msra.mxu0 0.0
  %321 = vmatprep.subr.mxu0 0.0
  %322 = vmatpush1.msra.mxu0 0.0
  %323 = vmatprep.subr.mxu0 0.0
  %324 = vmatpush1.msra.mxu0 0.0
  %325 = vmatprep.subr.mxu0 0.0
  %326 = vmatpush1.msra.mxu0 0.0
  %327 = vmatprep.subr.mxu0 0.0
  %328 = vmatpush1.msra.mxu0 0.0
  %329 = vmatprep.subr.mxu0 0.0
  %330 = vmatpush1.msra.mxu0 0.0
  %331 = vmatprep.subr.mxu0 0.0
  %332 = vmatpush1.msra.mxu0 0.0
  %333 = vmatprep.subr.mxu0 0.0
  %334 = vmatpush1.msra.mxu0 0.0
  %335 = vmatprep.subr.mxu0 0.0
  %336 = vmatpush1.msra.mxu0 %v206
  %337 = vmatprep.subr.mxu0 0.0
  %338 = vmatpush1.msra.mxu0 %v205
  %339 = vmatprep.subr.mxu0 0.0
  %340 = vmatpush1.msra.mxu0 %v204
  %341 = vmatprep.subr.mxu0 0.0
  %342 = vmatpush1.msra.mxu0 %v203
  %343 = vmatprep.subr.mxu0 0.0
  %344 = vmatpush2.msra.mxu0 0.0
  %345 = vmatprep.subr.mxu0 0.0
  %346 = vmatpush2.msra.mxu0 0.0
  %347 = vmatprep.subr.mxu0 0.0
  %348 = vmatpush2.msra.mxu0 0.0
  %349 = vmatprep.subr.mxu0 0.0
  %350 = vmatpush2.msra.mxu0 0.0
  %351 = vmatprep.subr.mxu0 0.0
  %352 = vmatpush2.msra.mxu0 0.0
  %353 = vmatprep.subr.mxu0 0.0
  %354 = vmatpush2.msra.mxu0 0.0
  %355 = vmatprep.subr.mxu0 0.0
  %356 = vmatpush2.msra.mxu0 0.0
  %357 = vmatprep.subr.mxu0 0.0
  %358 = vmatpush2.msra.mxu0 0.0
  %359 = vmatprep.subr.mxu0 0.0
  %360 = vmatpush2.msra.mxu0 0.0
  %361 = vmatprep.subr.mxu0 0.0
  %362 = vmatpush2.msra.mxu0 0.0
  %363 = vmatprep.subr.mxu0 0.0
  %364 = vmatpush2.msra.mxu0 0.0
  %365 = vmatprep.subr.mxu0 0.0
  %366 = vmatpush2.msra.mxu0 0.0
  %367 = vmatprep.subr.mxu0 0.0
  %368 = vmatpush2.msra.mxu0 0.0
  %369 = vmatprep.subr.mxu0 0.0
  %370 = vmatpush2.msra.mxu0 0.0
  %371 = vmatprep.subr.mxu0 0.0
  %372 = vmatpush2.msra.mxu0 0.0
  %373 = vmatprep.subr.mxu0 0.0
  %374 = vmatpush2.msra.mxu0 0.0
  %375 = vmatprep.mubr.f32.mxu0 0.0
  %376 = vmatmul.mubr.f32.gmra.mxu0 %v309
  %v377 = vpop.f32.mrf.mxu0
  %v378 = vadd.f32 0.0, %v377
  %v379 = vpop.f32.mrf.mxu0
  %380 = vdwg.mxu0
  %v381 = vadd.f32 %v305, %v378
  %v382 = vtanh.pop %v381
  %v383 = vmul.f32 %v382, 0.5
  %v384 = vadd.f32 %v383, 0.5
  %v385 = vsel %vm32, %v382, %v384
  %v386 = vmul.f32 %v385, %v297
  %388 = vrot.lane.b32.xlu0 %v385, 64
  %v389 = vpop.permute.xlu0 %388
  %v391 = vmul.f32 %v385, %v389
  %393 = vrot.lane.b32.xlu0 %v391, 32
  %v394 = vpop.permute.xlu0 %393
  %v396 = vadd.f32 %v386, %v394
  %v397 = vtanh.pop %v396
  %399 = vrot.lane.b32.xlu0 %v397, 64
  %v400 = vpop.permute.xlu0 %399
  %v402 = vmul.f32 %v385, %v400
  %s403 = scalar_lea.vmem [#allocation2], 16
  %v404 = vld [vmem:[%s403] sm:$0xff]
  %406 = vrot.lane.b32.xlu0 %v402, 32
  %v407 = vpop.permute.xlu0 %406
  %v408 = vsel %vm208, %v407, 0
  %410 = vmatprep.subr.mxu0 0.0
  %411 = vmatpush1.msra.mxu0 0.0
  %412 = vmatprep.subr.mxu0 0.0
  %413 = vmatpush1.msra.mxu0 0.0
  %414 = vmatprep.subr.mxu0 0.0
  %415 = vmatpush1.msra.mxu0 0.0
  %416 = vmatprep.subr.mxu0 0.0
  %417 = vmatpush1.msra.mxu0 0.0
  %418 = vmatprep.subr.mxu0 0.0
  %419 = vmatpush1.msra.mxu0 0.0
  %420 = vmatprep.subr.mxu0 0.0
  %421 = vmatpush1.msra.mxu0 0.0
  %422 = vmatprep.subr.mxu0 0.0
  %423 = vmatpush1.msra.mxu0 0.0
  %424 = vmatprep.subr.mxu0 0.0
  %425 = vmatpush1.msra.mxu0 0.0
  %426 = vmatprep.subr.mxu0 0.0
  %427 = vmatpush1.msra.mxu0 0.0
  %428 = vmatprep.subr.mxu0 0.0
  %429 = vmatpush1.msra.mxu0 0.0
  %430 = vmatprep.subr.mxu0 0.0
  %431 = vmatpush1.msra.mxu0 0.0
  %432 = vmatprep.subr.mxu0 0.0
  %433 = vmatpush1.msra.mxu0 0.0
  %434 = vmatprep.subr.mxu0 0.0
  %435 = vmatpush1.msra.mxu0 %v206
  %436 = vmatprep.subr.mxu0 0.0
  %437 = vmatpush1.msra.mxu0 %v205
  %438 = vmatprep.subr.mxu0 0.0
  %439 = vmatpush1.msra.mxu0 %v204
  %440 = vmatprep.subr.mxu0 0.0
  %441 = vmatpush1.msra.mxu0 %v203
  %442 = vmatprep.subr.mxu0 0.0
  %443 = vmatpush2.msra.mxu0 0.0
  %444 = vmatprep.subr.mxu0 0.0
  %445 = vmatpush2.msra.mxu0 0.0
  %446 = vmatprep.subr.mxu0 0.0
  %447 = vmatpush2.msra.mxu0 0.0
  %448 = vmatprep.subr.mxu0 0.0
  %449 = vmatpush2.msra.mxu0 0.0
  %450 = vmatprep.subr.mxu0 0.0
  %451 = vmatpush2.msra.mxu0 0.0
  %452 = vmatprep.subr.mxu0 0.0
  %453 = vmatpush2.msra.mxu0 0.0
  %454 = vmatprep.subr.mxu0 0.0
  %455 = vmatpush2.msra.mxu0 0.0
  %456 = vmatprep.subr.mxu0 0.0
  %457 = vmatpush2.msra.mxu0 0.0
  %458 = vmatprep.subr.mxu0 0.0
  %459 = vmatpush2.msra.mxu0 0.0
  %460 = vmatprep.subr.mxu0 0.0
  %461 = vmatpush2.msra.mxu0 0.0
  %462 = vmatprep.subr.mxu0 0.0
  %463 = vmatpush2.msra.mxu0 0.0
  %464 = vmatprep.subr.mxu0 0.0
  %465 = vmatpush2.msra.mxu0 0.0
  %466 = vmatprep.subr.mxu0 0.0
  %467 = vmatpush2.msra.mxu0 0.0
  %468 = vmatprep.subr.mxu0 0.0
  %469 = vmatpush2.msra.mxu0 0.0
  %470 = vmatprep.subr.mxu0 0.0
  %471 = vmatpush2.msra.mxu0 0.0
  %472 = vmatprep.subr.mxu0 0.0
  %473 = vmatpush2.msra.mxu0 0.0
  %474 = vmatprep.mubr.f32.mxu0 0.0
  %475 = vmatmul.mubr.f32.gmra.mxu0 %v408
  %v476 = vpop.f32.mrf.mxu0
  %v477 = vadd.f32 0.0, %v476
  %v478 = vpop.f32.mrf.mxu0
  %479 = vdwg.mxu0
  %v480 = vadd.f32 %v404, %v477
  %v481 = vtanh.pop %v480
  %v482 = vmul.f32 %v481, 0.5
  %v483 = vadd.f32 %v482, 0.5
  %v484 = vsel %vm32, %v481, %v483
  %v485 = vmul.f32 %v484, %v396
  %487 = vrot.lane.b32.xlu0 %v484, 64
  %v488 = vpop.permute.xlu0 %487
  %v490 = vmul.f32 %v484, %v488
  %492 = vrot.lane.b32.xlu0 %v490, 32
  %v493 = vpop.permute.xlu0 %492
  %v495 = vadd.f32 %v485, %v493
  %v496 = vtanh.pop %v495
  %498 = vrot.lane.b32.xlu0 %v496, 64
  %v499 = vpop.permute.xlu0 %498
  %v501 = vmul.f32 %v484, %v499
  %s502 = scalar_lea.vmem [#allocation2], 24
  %v503 = vld [vmem:[%s502] sm:$0xff]
  %505 = vrot.lane.b32.xlu0 %v501, 32
  %v506 = vpop.permute.xlu0 %505
  %v507 = vsel %vm208, %v506, 0
  %509 = vmatprep.subr.mxu0 0.0
  %510 = vmatpush1.msra.mxu0 0.0
  %511 = vmatprep.subr.mxu0 0.0
  %512 = vmatpush1.msra.mxu0 0.0
  %513 = vmatprep.subr.mxu0 0.0
  %514 = vmatpush1.msra.mxu0 0.0
  %515 = vmatprep.subr.mxu0 0.0
  %516 = vmatpush1.msra.mxu0 0.0
  %517 = vmatprep.subr.mxu0 0.0
  %518 = vmatpush1.msra.mxu0 0.0
  %519 = vmatprep.subr.mxu0 0.0
  %520 = vmatpush1.msra.mxu0 0.0
  %521 = vmatprep.subr.mxu0 0.0
  %522 = vmatpush1.msra.mxu0 0.0
  %523 = vmatprep.subr.mxu0 0.0
  %524 = vmatpush1.msra.mxu0 0.0
  %525 = vmatprep.subr.mxu0 0.0
  %526 = vmatpush1.msra.mxu0 0.0
  %527 = vmatprep.subr.mxu0 0.0
  %528 = vmatpush1.msra.mxu0 0.0
  %529 = vmatprep.subr.mxu0 0.0
  %530 = vmatpush1.msra.mxu0 0.0
  %531 = vmatprep.subr.mxu0 0.0
  %532 = vmatpush1.msra.mxu0 0.0
  %533 = vmatprep.subr.mxu0 0.0
  %534 = vmatpush1.msra.mxu0 %v206
  %535 = vmatprep.subr.mxu0 0.0
  %536 = vmatpush1.msra.mxu0 %v205
  %537 = vmatprep.subr.mxu0 0.0
  %538 = vmatpush1.msra.mxu0 %v204
  %539 = vmatprep.subr.mxu0 0.0
  %540 = vmatpush1.msra.mxu0 %v203
  %541 = vmatprep.subr.mxu0 0.0
  %542 = vmatpush2.msra.mxu0 0.0
  %543 = vmatprep.subr.mxu0 0.0
  %544 = vmatpush2.msra.mxu0 0.0
  %545 = vmatprep.subr.mxu0 0.0
  %546 = vmatpush2.msra.mxu0 0.0
  %547 = vmatprep.subr.mxu0 0.0
  %548 = vmatpush2.msra.mxu0 0.0
  %549 = vmatprep.subr.mxu0 0.0
  %550 = vmatpush2.msra.mxu0 0.0
  %551 = vmatprep.subr.mxu0 0.0
  %552 = vmatpush2.msra.mxu0 0.0
  %553 = vmatprep.subr.mxu0 0.0
  %554 = vmatpush2.msra.mxu0 0.0
  %555 = vmatprep.subr.mxu0 0.0
  %556 = vmatpush2.msra.mxu0 0.0
  %557 = vmatprep.subr.mxu0 0.0
  %558 = vmatpush2.msra.mxu0 0.0
  %559 = vmatprep.subr.mxu0 0.0
  %560 = vmatpush2.msra.mxu0 0.0
  %561 = vmatprep.subr.mxu0 0.0
  %562 = vmatpush2.msra.mxu0 0.0
  %563 = vmatprep.subr.mxu0 0.0
  %564 = vmatpush2.msra.mxu0 0.0
  %565 = vmatprep.subr.mxu0 0.0
  %566 = vmatpush2.msra.mxu0 0.0
  %567 = vmatprep.subr.mxu0 0.0
  %568 = vmatpush2.msra.mxu0 0.0
  %569 = vmatprep.subr.mxu0 0.0
  %570 = vmatpush2.msra.mxu0 0.0
  %571 = vmatprep.subr.mxu0 0.0
  %572 = vmatpush2.msra.mxu0 0.0
  %573 = vmatprep.mubr.f32.mxu0 0.0
  %574 = vmatmul.mubr.f32.gmra.mxu0 %v507
  %v575 = vpop.f32.mrf.mxu0
  %v576 = vadd.f32 0.0, %v575
  %v577 = vpop.f32.mrf.mxu0
  %578 = vdwg.mxu0
  %v579 = vadd.f32 %v503, %v576
  %v580 = vtanh.pop %v579
  %v581 = vmul.f32 %v580, 0.5
  %v582 = vadd.f32 %v581, 0.5
  %v583 = vsel %vm32, %v580, %v582
  %v584 = vmul.f32 %v583, %v495
  %586 = vrot.lane.b32.xlu0 %v583, 64
  %v587 = vpop.permute.xlu0 %586
  %v589 = vmul.f32 %v583, %v587
  %591 = vrot.lane.b32.xlu0 %v589, 32
  %v592 = vpop.permute.xlu0 %591
  %v594 = vadd.f32 %v584, %v592
  %v595 = vtanh.pop %v594
  %597 = vrot.lane.b32.xlu0 %v595, 64
  %v598 = vpop.permute.xlu0 %597
  %v600 = vmul.f32 %v583, %v598
  %s601 = scalar_lea.vmem [#allocation2], 32
  %v602 = vld [vmem:[%s601] sm:$0xff]
  %604 = vrot.lane.b32.xlu0 %v600, 32
  %v605 = vpop.permute.xlu0 %604
  %v606 = vsel %vm208, %v605, 0
  %608 = vmatprep.subr.mxu0 0.0
  %609 = vmatpush1.msra.mxu0 0.0
  %610 = vmatprep.subr.mxu0 0.0
  %611 = vmatpush1.msra.mxu0 0.0
  %612 = vmatprep.subr.mxu0 0.0
  %613 = vmatpush1.msra.mxu0 0.0
  %614 = vmatprep.subr.mxu0 0.0
  %615 = vmatpush1.msra.mxu0 0.0
  %616 = vmatprep.subr.mxu0 0.0
  %617 = vmatpush1.msra.mxu0 0.0
  %618 = vmatprep.subr.mxu0 0.0
  %619 = vmatpush1.msra.mxu0 0.0
  %620 = vmatprep.subr.mxu0 0.0
  %621 = vmatpush1.msra.mxu0 0.0
  %622 = vmatprep.subr.mxu0 0.0
  %623 = vmatpush1.msra.mxu0 0.0
  %624 = vmatprep.subr.mxu0 0.0
  %625 = vmatpush1.msra.mxu0 0.0
  %626 = vmatprep.subr.mxu0 0.0
  %627 = vmatpush1.msra.mxu0 0.0
  %628 = vmatprep.subr.mxu0 0.0
  %629 = vmatpush1.msra.mxu0 0.0
  %630 = vmatprep.subr.mxu0 0.0
  %631 = vmatpush1.msra.mxu0 0.0
  %632 = vmatprep.subr.mxu0 0.0
  %633 = vmatpush1.msra.mxu0 %v206
  %634 = vmatprep.subr.mxu0 0.0
  %635 = vmatpush1.msra.mxu0 %v205
  %636 = vmatprep.subr.mxu0 0.0
  %637 = vmatpush1.msra.mxu0 %v204
  %638 = vmatprep.subr.mxu0 0.0
  %639 = vmatpush1.msra.mxu0 %v203
  %640 = vmatprep.subr.mxu0 0.0
  %641 = vmatpush2.msra.mxu0 0.0
  %642 = vmatprep.subr.mxu0 0.0
  %643 = vmatpush2.msra.mxu0 0.0
  %644 = vmatprep.subr.mxu0 0.0
  %645 = vmatpush2.msra.mxu0 0.0
  %646 = vmatprep.subr.mxu0 0.0
  %647 = vmatpush2.msra.mxu0 0.0
  %648 = vmatprep.subr.mxu0 0.0
  %649 = vmatpush2.msra.mxu0 0.0
  %650 = vmatprep.subr.mxu0 0.0
  %651 = vmatpush2.msra.mxu0 0.0
  %652 = vmatprep.subr.mxu0 0.0
  %653 = vmatpush2.msra.mxu0 0.0
  %654 = vmatprep.subr.mxu0 0.0
  %655 = vmatpush2.msra.mxu0 0.0
  %656 = vmatprep.subr.mxu0 0.0
  %657 = vmatpush2.msra.mxu0 0.0
  %658 = vmatprep.subr.mxu0 0.0
  %659 = vmatpush2.msra.mxu0 0.0
  %660 = vmatprep.subr.mxu0 0.0
  %661 = vmatpush2.msra.mxu0 0.0
  %662 = vmatprep.subr.mxu0 0.0
  %663 = vmatpush2.msra.mxu0 0.0
  %664 = vmatprep.subr.mxu0 0.0
  %665 = vmatpush2.msra.mxu0 0.0
  %666 = vmatprep.subr.mxu0 0.0
  %667 = vmatpush2.msra.mxu0 0.0
  %668 = vmatprep.subr.mxu0 0.0
  %669 = vmatpush2.msra.mxu0 0.0
  %670 = vmatprep.subr.mxu0 0.0
  %671 = vmatpush2.msra.mxu0 0.0
  %672 = vmatprep.mubr.f32.mxu0 0.0
  %673 = vmatmul.mubr.f32.gmra.mxu0 %v606
  %v674 = vpop.f32.mrf.mxu0
  %v675 = vadd.f32 0.0, %v674
  %v676 = vpop.f32.mrf.mxu0
  %677 = vdwg.mxu0
  %v678 = vadd.f32 %v602, %v675
  %v679 = vtanh.pop %v678
  %v680 = vmul.f32 %v679, 0.5
  %v681 = vadd.f32 %v680, 0.5
  %v682 = vsel %vm32, %v679, %v681
  %v683 = vmul.f32 %v682, %v594
  %685 = vrot.lane.b32.xlu0 %v682, 64
  %v686 = vpop.permute.xlu0 %685
  %v688 = vmul.f32 %v682, %v686
  %690 = vrot.lane.b32.xlu0 %v688, 32
  %v691 = vpop.permute.xlu0 %690
  %v693 = vadd.f32 %v683, %v691
  %v694 = vtanh.pop %v693
  %696 = vrot.lane.b32.xlu0 %v694, 64
  %v697 = vpop.permute.xlu0 %696
  %v699 = vmul.f32 %v682, %v697
  %s700 = scalar_lea.vmem [#allocation2], 40
  %v701 = vld [vmem:[%s700] sm:$0xff]
  %703 = vrot.lane.b32.xlu0 %v699, 32
  %v704 = vpop.permute.xlu0 %703
  %v705 = vsel %vm208, %v704, 0
  %707 = vmatprep.subr.mxu0 0.0
  %708 = vmatpush1.msra.mxu0 0.0
  %709 = vmatprep.subr.mxu0 0.0
  %710 = vmatpush1.msra.mxu0 0.0
  %711 = vmatprep.subr.mxu0 0.0
  %712 = vmatpush1.msra.mxu0 0.0
  %713 = vmatprep.subr.mxu0 0.0
  %714 = vmatpush1.msra.mxu0 0.0
  %715 = vmatprep.subr.mxu0 0.0
  %716 = vmatpush1.msra.mxu0 0.0
  %717 = vmatprep.subr.mxu0 0.0
  %718 = vmatpush1.msra.mxu0 0.0
  %719 = vmatprep.subr.mxu0 0.0
  %720 = vmatpush1.msra.mxu0 0.0
  %721 = vmatprep.subr.mxu0 0.0
  %722 = vmatpush1.msra.mxu0 0.0
  %723 = vmatprep.subr.mxu0 0.0
  %724 = vmatpush1.msra.mxu0 0.0
  %725 = vmatprep.subr.mxu0 0.0
  %726 = vmatpush1.msra.mxu0 0.0
  %727 = vmatprep.subr.mxu0 0.0
  %728 = vmatpush1.msra.mxu0 0.0
  %729 = vmatprep.subr.mxu0 0.0
  %730 = vmatpush1.msra.mxu0 0.0
  %731 = vmatprep.subr.mxu0 0.0
  %732 = vmatpush1.msra.mxu0 %v206
  %733 = vmatprep.subr.mxu0 0.0
  %734 = vmatpush1.msra.mxu0 %v205
  %735 = vmatprep.subr.mxu0 0.0
  %736 = vmatpush1.msra.mxu0 %v204
  %737 = vmatprep.subr.mxu0 0.0
  %738 = vmatpush1.msra.mxu0 %v203
  %739 = vmatprep.subr.mxu0 0.0
  %740 = vmatpush2.msra.mxu0 0.0
  %741 = vmatprep.subr.mxu0 0.0
  %742 = vmatpush2.msra.mxu0 0.0
  %743 = vmatprep.subr.mxu0 0.0
  %744 = vmatpush2.msra.mxu0 0.0
  %745 = vmatprep.subr.mxu0 0.0
  %746 = vmatpush2.msra.mxu0 0.0
  %747 = vmatprep.subr.mxu0 0.0
  %748 = vmatpush2.msra.mxu0 0.0
  %749 = vmatprep.subr.mxu0 0.0
  %750 = vmatpush2.msra.mxu0 0.0
  %751 = vmatprep.subr.mxu0 0.0
  %752 = vmatpush2.msra.mxu0 0.0
  %753 = vmatprep.subr.mxu0 0.0
  %754 = vmatpush2.msra.mxu0 0.0
  %755 = vmatprep.subr.mxu0 0.0
  %756 = vmatpush2.msra.mxu0 0.0
  %757 = vmatprep.subr.mxu0 0.0
  %758 = vmatpush2.msra.mxu0 0.0
  %759 = vmatprep.subr.mxu0 0.0
  %760 = vmatpush2.msra.mxu0 0.0
  %761 = vmatprep.subr.mxu0 0.0
  %762 = vmatpush2.msra.mxu0 0.0
  %763 = vmatprep.subr.mxu0 0.0
  %764 = vmatpush2.msra.mxu0 0.0
  %765 = vmatprep.subr.mxu0 0.0
  %766 = vmatpush2.msra.mxu0 0.0
  %767 = vmatprep.subr.mxu0 0.0
  %768 = vmatpush2.msra.mxu0 0.0
  %769 = vmatprep.subr.mxu0 0.0
  %770 = vmatpush2.msra.mxu0 0.0
  %771 = vmatprep.mubr.f32.mxu0 0.0
  %772 = vmatmul.mubr.f32.gmra.mxu0 %v705
  %v773 = vpop.f32.mrf.mxu0
  %v774 = vadd.f32 0.0, %v773
  %v775 = vpop.f32.mrf.mxu0
  %776 = vdwg.mxu0
  %v777 = vadd.f32 %v701, %v774
  %v778 = vtanh.pop %v777
  %v779 = vmul.f32 %v778, 0.5
  %v780 = vadd.f32 %v779, 0.5
  %v781 = vsel %vm32, %v778, %v780
  %v782 = vmul.f32 %v781, %v693
  %784 = vrot.lane.b32.xlu0 %v781, 64
  %v785 = vpop.permute.xlu0 %784
  %v787 = vmul.f32 %v781, %v785
  %789 = vrot.lane.b32.xlu0 %v787, 32
  %v790 = vpop.permute.xlu0 %789
  %v792 = vadd.f32 %v782, %v790
  %v793 = vtanh.pop %v792
  %795 = vrot.lane.b32.xlu0 %v793, 64
  %v796 = vpop.permute.xlu0 %795
  %v798 = vmul.f32 %v781, %v796
  %s799 = scalar_lea.vmem [#allocation2], 48
  %v800 = vld [vmem:[%s799] sm:$0xff]
  %802 = vrot.lane.b32.xlu0 %v798, 32
  %v803 = vpop.permute.xlu0 %802
  %v804 = vsel %vm208, %v803, 0
  %806 = vmatprep.subr.mxu0 0.0
  %807 = vmatpush1.msra.mxu0 0.0
  %808 = vmatprep.subr.mxu0 0.0
  %809 = vmatpush1.msra.mxu0 0.0
  %810 = vmatprep.subr.mxu0 0.0
  %811 = vmatpush1.msra.mxu0 0.0
  %812 = vmatprep.subr.mxu0 0.0
  %813 = vmatpush1.msra.mxu0 0.0
  %814 = vmatprep.subr.mxu0 0.0
  %815 = vmatpush1.msra.mxu0 0.0
  %816 = vmatprep.subr.mxu0 0.0
  %817 = vmatpush1.msra.mxu0 0.0
  %818 = vmatprep.subr.mxu0 0.0
  %819 = vmatpush1.msra.mxu0 0.0
  %820 = vmatprep.subr.mxu0 0.0
  %821 = vmatpush1.msra.mxu0 0.0
  %822 = vmatprep.subr.mxu0 0.0
  %823 = vmatpush1.msra.mxu0 0.0
  %824 = vmatprep.subr.mxu0 0.0
  %825 = vmatpush1.msra.mxu0 0.0
  %826 = vmatprep.subr.mxu0 0.0
  %827 = vmatpush1.msra.mxu0 0.0
  %828 = vmatprep.subr.mxu0 0.0
  %829 = vmatpush1.msra.mxu0 0.0
  %830 = vmatprep.subr.mxu0 0.0
  %831 = vmatpush1.msra.mxu0 %v206
  %832 = vmatprep.subr.mxu0 0.0
  %833 = vmatpush1.msra.mxu0 %v205
  %834 = vmatprep.subr.mxu0 0.0
  %835 = vmatpush1.msra.mxu0 %v204
  %836 = vmatprep.subr.mxu0 0.0
  %837 = vmatpush1.msra.mxu0 %v203
  %838 = vmatprep.subr.mxu0 0.0
  %839 = vmatpush2.msra.mxu0 0.0
  %840 = vmatprep.subr.mxu0 0.0
  %841 = vmatpush2.msra.mxu0 0.0
  %842 = vmatprep.subr.mxu0 0.0
  %843 = vmatpush2.msra.mxu0 0.0
  %844 = vmatprep.subr.mxu0 0.0
  %845 = vmatpush2.msra.mxu0 0.0
  %846 = vmatprep.subr.mxu0 0.0
  %847 = vmatpush2.msra.mxu0 0.0
  %848 = vmatprep.subr.mxu0 0.0
  %849 = vmatpush2.msra.mxu0 0.0
  %850 = vmatprep.subr.mxu0 0.0
  %851 = vmatpush2.msra.mxu0 0.0
  %852 = vmatprep.subr.mxu0 0.0
  %853 = vmatpush2.msra.mxu0 0.0
  %854 = vmatprep.subr.mxu0 0.0
  %855 = vmatpush2.msra.mxu0 0.0
  %856 = vmatprep.subr.mxu0 0.0
  %857 = vmatpush2.msra.mxu0 0.0
  %858 = vmatprep.subr.mxu0 0.0
  %859 = vmatpush2.msra.mxu0 0.0
  %860 = vmatprep.subr.mxu0 0.0
  %861 = vmatpush2.msra.mxu0 0.0
  %862 = vmatprep.subr.mxu0 0.0
  %863 = vmatpush2.msra.mxu0 0.0
  %864 = vmatprep.subr.mxu0 0.0
  %865 = vmatpush2.msra.mxu0 0.0
  %866 = vmatprep.subr.mxu0 0.0
  %867 = vmatpush2.msra.mxu0 0.0
  %868 = vmatprep.subr.mxu0 0.0
  %869 = vmatpush2.msra.mxu0 0.0
  %870 = vmatprep.mubr.f32.mxu0 0.0
  %871 = vmatmul.mubr.f32.gmra.mxu0 %v804
  %v872 = vpop.f32.mrf.mxu0
  %v873 = vadd.f32 0.0, %v872
  %v874 = vpop.f32.mrf.mxu0
  %875 = vdwg.mxu0
  %v876 = vadd.f32 %v800, %v873
  %v877 = vtanh.pop %v876
  %v878 = vmul.f32 %v877, 0.5
  %v879 = vadd.f32 %v878, 0.5
  %v880 = vsel %vm32, %v877, %v879
  %v881 = vmul.f32 %v880, %v792
  %883 = vrot.lane.b32.xlu0 %v880, 64
  %v884 = vpop.permute.xlu0 %883
  %v886 = vmul.f32 %v880, %v884
  %888 = vrot.lane.b32.xlu0 %v886, 32
  %v889 = vpop.permute.xlu0 %888
  %v891 = vadd.f32 %v881, %v889
  %v892 = vtanh.pop %v891
  %894 = vrot.lane.b32.xlu0 %v892, 64
  %v895 = vpop.permute.xlu0 %894
  %v897 = vmul.f32 %v880, %v895
  %s898 = scalar_lea.vmem [#allocation2], 56
  %v899 = vld [vmem:[%s898] sm:$0xff]
  %901 = vrot.lane.b32.xlu0 %v897, 32
  %v902 = vpop.permute.xlu0 %901
  %v903 = vsel %vm208, %v902, 0
  %905 = vmatprep.subr.mxu0 0.0
  %906 = vmatpush1.msra.mxu0 0.0
  %907 = vmatprep.subr.mxu0 0.0
  %908 = vmatpush1.msra.mxu0 0.0
  %909 = vmatprep.subr.mxu0 0.0
  %910 = vmatpush1.msra.mxu0 0.0
  %911 = vmatprep.subr.mxu0 0.0
  %912 = vmatpush1.msra.mxu0 0.0
  %913 = vmatprep.subr.mxu0 0.0
  %914 = vmatpush1.msra.mxu0 0.0
  %915 = vmatprep.subr.mxu0 0.0
  %916 = vmatpush1.msra.mxu0 0.0
  %917 = vmatprep.subr.mxu0 0.0
  %918 = vmatpush1.msra.mxu0 0.0
  %919 = vmatprep.subr.mxu0 0.0
  %920 = vmatpush1.msra.mxu0 0.0
  %921 = vmatprep.subr.mxu0 0.0
  %922 = vmatpush1.msra.mxu0 0.0
  %923 = vmatprep.subr.mxu0 0.0
  %924 = vmatpush1.msra.mxu0 0.0
  %925 = vmatprep.subr.mxu0 0.0
  %926 = vmatpush1.msra.mxu0 0.0
  %927 = vmatprep.subr.mxu0 0.0
  %928 = vmatpush1.msra.mxu0 0.0
  %929 = vmatprep.subr.mxu0 0.0
  %930 = vmatpush1.msra.mxu0 %v206
  %931 = vmatprep.subr.mxu0 0.0
  %932 = vmatpush1.msra.mxu0 %v205
  %933 = vmatprep.subr.mxu0 0.0
  %934 = vmatpush1.msra.mxu0 %v204
  %935 = vmatprep.subr.mxu0 0.0
  %936 = vmatpush1.msra.mxu0 %v203
  %937 = vmatprep.subr.mxu0 0.0
  %938 = vmatpush2.msra.mxu0 0.0
  %939 = vmatprep.subr.mxu0 0.0
  %940 = vmatpush2.msra.mxu0 0.0
  %941 = vmatprep.subr.mxu0 0.0
  %942 = vmatpush2.msra.mxu0 0.0
  %943 = vmatprep.subr.mxu0 0.0
  %944 = vmatpush2.msra.mxu0 0.0
  %945 = vmatprep.subr.mxu0 0.0
  %946 = vmatpush2.msra.mxu0 0.0
  %947 = vmatprep.subr.mxu0 0.0
  %948 = vmatpush2.msra.mxu0 0.0
  %949 = vmatprep.subr.mxu0 0.0
  %950 = vmatpush2.msra.mxu0 0.0
  %951 = vmatprep.subr.mxu0 0.0
  %952 = vmatpush2.msra.mxu0 0.0
  %953 = vmatprep.subr.mxu0 0.0
  %954 = vmatpush2.msra.mxu0 0.0
  %955 = vmatprep.subr.mxu0 0.0
  %956 = vmatpush2.msra.mxu0 0.0
  %957 = vmatprep.subr.mxu0 0.0
  %958 = vmatpush2.msra.mxu0 0.0
  %959 = vmatprep.subr.mxu0 0.0
  %960 = vmatpush2.msra.mxu0 0.0
  %961 = vmatprep.subr.mxu0 0.0
  %962 = vmatpush2.msra.mxu0 0.0
  %963 = vmatprep.subr.mxu0 0.0
  %964 = vmatpush2.msra.mxu0 0.0
  %965 = vmatprep.subr.mxu0 0.0
  %966 = vmatpush2.msra.mxu0 0.0
  %967 = vmatprep.subr.mxu0 0.0
  %968 = vmatpush2.msra.mxu0 0.0
  %969 = vmatprep.mubr.f32.mxu0 0.0
  %970 = vmatmul.mubr.f32.gmra.mxu0 %v903
  %v971 = vpop.f32.mrf.mxu0
  %v972 = vadd.f32 0.0, %v971
  %v973 = vpop.f32.mrf.mxu0
  %974 = vdwg.mxu0
  %v975 = vadd.f32 %v899, %v972
  %v976 = vtanh.pop %v975
  %v977 = vmul.f32 %v976, 0.5
  %v978 = vadd.f32 %v977, 0.5
  %v979 = vsel %vm32, %v976, %v978
  %v980 = vmul.f32 %v979, %v891
  %982 = vrot.lane.b32.xlu0 %v979, 64
  %v983 = vpop.permute.xlu0 %982
  %v985 = vmul.f32 %v979, %v983
  %987 = vrot.lane.b32.xlu0 %v985, 32
  %v988 = vpop.permute.xlu0 %987
  %v990 = vadd.f32 %v980, %v988
  %v991 = vtanh.pop %v990
  %993 = vrot.lane.b32.xlu0 %v991, 64
  %v994 = vpop.permute.xlu0 %993
  %v996 = vmul.f32 %v979, %v994
  %998 = vrot.lane.b32.xlu0 %v996, 32
  %v999 = vpop.permute.xlu0 %998
  %1001 = vst.msk [vmem:[#allocation3] sm:$0xff] %vm208, %v999
  %v1002 = vld [vmem:[#allocation3] sm:$0xff]
  %v1003 = vld [vmem:[%s4] sm:$0xff]
  %v1004 = vld [vmem:[%s4 + $0x8] sm:$0xff]
  %v1005 = vld [vmem:[%s4 + $0x10] sm:$0xff]
  %v1006 = vld [vmem:[%s4 + $0x18] sm:$0xff]
  %v1007 = vld [vmem:[#allocation4] sm:$0x1]
  %v1009 = vlaneseq
  %v1010 = vshrl.u32 %v1009, 7
  %v1011 = vsub.s32 0, %v1010
  %v1012 = vrot.slane %v1007, %v1011
  %v1015 = vsel %vm208, %v1002, 0
  %1017 = vmatprep.subr.mxu0 0.0
  %1018 = vmatpush1.msra.mxu0 0.0
  %1019 = vmatprep.subr.mxu0 0.0
  %1020 = vmatpush1.msra.mxu0 0.0
  %1021 = vmatprep.subr.mxu0 0.0
  %1022 = vmatpush1.msra.mxu0 0.0
  %1023 = vmatprep.subr.mxu0 0.0
  %1024 = vmatpush1.msra.mxu0 0.0
  %1025 = vmatprep.subr.mxu0 0.0
  %1026 = vmatpush1.msra.mxu0 0.0
  %1027 = vmatprep.subr.mxu0 0.0
  %1028 = vmatpush1.msra.mxu0 0.0
  %1029 = vmatprep.subr.mxu0 0.0
  %1030 = vmatpush1.msra.mxu0 0.0
  %1031 = vmatprep.subr.mxu0 0.0
  %1032 = vmatpush1.msra.mxu0 0.0
  %1033 = vmatprep.subr.mxu0 0.0
  %1034 = vmatpush1.msra.mxu0 0.0
  %1035 = vmatprep.subr.mxu0 0.0
  %1036 = vmatpush1.msra.mxu0 0.0
  %1037 = vmatprep.subr.mxu0 0.0
  %1038 = vmatpush1.msra.mxu0 0.0
  %1039 = vmatprep.subr.mxu0 0.0
  %1040 = vmatpush1.msra.mxu0 0.0
  %1041 = vmatprep.subr.mxu0 0.0
  %1042 = vmatpush1.msra.mxu0 %v1006
  %1043 = vmatprep.subr.mxu0 0.0
  %1044 = vmatpush1.msra.mxu0 %v1005
  %1045 = vmatprep.subr.mxu0 0.0
  %1046 = vmatpush1.msra.mxu0 %v1004
  %1047 = vmatprep.subr.mxu0 0.0
  %1048 = vmatpush1.msra.mxu0 %v1003
  %1049 = vmatprep.subr.mxu0 0.0
  %1050 = vmatpush2.msra.mxu0 0.0
  %1051 = vmatprep.subr.mxu0 0.0
  %1052 = vmatpush2.msra.mxu0 0.0
  %1053 = vmatprep.subr.mxu0 0.0
  %1054 = vmatpush2.msra.mxu0 0.0
  %1055 = vmatprep.subr.mxu0 0.0
  %1056 = vmatpush2.msra.mxu0 0.0
  %1057 = vmatprep.subr.mxu0 0.0
  %1058 = vmatpush2.msra.mxu0 0.0
  %1059 = vmatprep.subr.mxu0 0.0
  %1060 = vmatpush2.msra.mxu0 0.0
  %1061 = vmatprep.subr.mxu0 0.0
  %1062 = vmatpush2.msra.mxu0 0.0
  %1063 = vmatprep.subr.mxu0 0.0
  %1064 = vmatpush2.msra.mxu0 0.0
  %1065 = vmatprep.subr.mxu0 0.0
  %1066 = vmatpush2.msra.mxu0 0.0
  %1067 = vmatprep.subr.mxu0 0.0
  %1068 = vmatpush2.msra.mxu0 0.0
  %1069 = vmatprep.subr.mxu0 0.0
  %1070 = vmatpush2.msra.mxu0 0.0
  %1071 = vmatprep.subr.mxu0 0.0
  %1072 = vmatpush2.msra.mxu0 0.0
  %1073 = vmatprep.subr.mxu0 0.0
  %1074 = vmatpush2.msra.mxu0 0.0
  %1075 = vmatprep.subr.mxu0 0.0
  %1076 = vmatpush2.msra.mxu0 0.0
  %1077 = vmatprep.subr.mxu0 0.0
  %1078 = vmatpush2.msra.mxu0 0.0
  %1079 = vmatprep.subr.mxu0 0.0
  %1080 = vmatpush2.msra.mxu0 0.0
  %1081 = vmatprep.mubr.f32.mxu0 0.0
  %1082 = vmatmul.mubr.f32.gmra.mxu0 %v1015
  %v1083 = vpop.f32.mrf.mxu0
  %v1084 = vadd.f32 %v1012, %v1083
  %v1085 = vpop.f32.mrf.mxu0
  %1086 = vdwg.mxu0
  %vm1087 = vcmask 7168
  %1088 = vst.msk [vmem:[%s6] sm:$0xff] %vm1087, %v1084
  // Predicated region
  $region26: #{lstm_prediction_forward.1} parent=0 // pred_check
    _
  $region27: #{lstm_prediction_forward.1} parent=0 // pred_check_branch
    %1090 = sbr.rel (0) target = $region29
  $region28: #{lstm_prediction_forward.1} parent=0 // pred_region
    _
  $region29: #{lstm_prediction_forward.1} parent=0 // pred_fallthru
    _
  // Predicated region
  $region30: #{lstm_prediction_forward.1} parent=0 // pred_check
    _
  $region31: #{lstm_prediction_forward.1} parent=0 // pred_check_branch
    %1092 = sbr.rel (0) target = $region33
  $region32: #{lstm_prediction_forward.1} parent=0 // pred_region
    _
  $region33: #{lstm_prediction_forward.1} parent=0 // pred_fallthru
    _

</llo_original>
